<compile_context>
chip_gen: v6e
topology: v6e:2x2x1
jax: 0.10.0
libtpu: 0.0.40
codegen_flags: <defaults>
</compile_context>

<pallas_src>
import math

import jax
import jax.numpy as jnp
import numpy as np
from jax import lax
from jax.experimental import pallas as pl
from jax.experimental.pallas import tpu as pltpu

EPS = 1e-5
DN = 6        # conv-output positions per spatial axis feeding the pooled head
P6 = DN ** 3  # 216 rows in the restricted im2col matmul
COUT = 64     # conv1 output channels
KPAD = 256    # contraction dim (7*27 = 189) zero-padded to a lane multiple
NCP = 128     # fc2 output lanes (num_classes padded for a lane-dense store)


# ---------------------------------------------------------------------------
# Fused kernel: conv1+BN+ReLU (im2col matmul) -> maxpool -> avgpool -> fc/fc2
# One grid step == one sample.
# ---------------------------------------------------------------------------
def fused_forward_kernel(p_ref, w_ref, scale_ref, shift_ref,
                         fcw_ref, fcb_ref, fc2w_ref, fc2b_ref,
                         x_ref, x1_ref):
    # ---- conv1 as im2col matmul on the MXU, folded BN, ReLU ----------------
    p = p_ref[0]                                                    # (216, 256) bf16
    y = jnp.dot(p, w_ref[...], preferred_element_type=jnp.float32)  # (216, 64) f32
    y = y * scale_ref[...] + shift_ref[...]
    y = jnp.maximum(y, 0.0)

    # ---- MaxPool3d(k=3, s=2, p=1) restricted to outputs (0..2)^3 -----------
    # Per axis the clamped windows are {0,1}, {1,2,3}, {3,4,5}.  The pooling is
    # separable, so reduce one spatial axis at a time with elementwise maxima
    # on lane-dense (..., 64) slabs (pure VPU work, no tiny window reductions).
    y3 = y.reshape(DN, DN, DN, COUT)                     # (d, h, w, c)
    d0 = jnp.maximum(y3[0], y3[1])
    d1 = jnp.maximum(jnp.maximum(y3[1], y3[2]), y3[3])
    d2 = jnp.maximum(jnp.maximum(y3[3], y3[4]), y3[5])
    md = jnp.stack([d0, d1, d2], axis=0)                 # (3, 6, 6, 64)
    h0 = jnp.maximum(md[:, 0], md[:, 1])
    h1 = jnp.maximum(jnp.maximum(md[:, 1], md[:, 2]), md[:, 3])
    h2 = jnp.maximum(jnp.maximum(md[:, 3], md[:, 4]), md[:, 5])
    mh = jnp.stack([h0, h1, h2], axis=0)                 # (3, 3, 6, 64)
    w0 = jnp.maximum(mh[:, :, 0, :], mh[:, :, 1, :])
    w1 = jnp.maximum(jnp.maximum(mh[:, :, 1, :], mh[:, :, 2, :]), mh[:, :, 3, :])
    w2 = jnp.maximum(jnp.maximum(mh[:, :, 3, :], mh[:, :, 4, :]), mh[:, :, 5, :])

    # ---- AvgPool3d(3): mean of the 27 maxpool outputs -----------------------
    s = w0 + w1 + w2                                     # (3, 3, 64)
    feat = jnp.sum(s.reshape(9, COUT), axis=0, keepdims=True) * (1.0 / 27.0)

    # ---- fc (64 -> 512) and fc2 (512 -> num_classes, lane-padded to 128) ----
    x1 = jnp.dot(feat.astype(jnp.bfloat16), fcw_ref[...],
                 preferred_element_type=jnp.float32) + fcb_ref[...]      # (1, 512)
    xo = jnp.dot(x1.astype(jnp.bfloat16), fc2w_ref[...],
                 preferred_element_type=jnp.float32) + fc2b_ref[...]     # (1, 128)
    x1_ref[0] = x1
    x_ref[0] = xo


# ---------------------------------------------------------------------------
# Wrapper: im2col construction (channels-last, restricted region), parameter
# folding / padding, single fused pallas_call.
# ---------------------------------------------------------------------------
def resnet_l0_forward(x, params):
    N, C, D, H, W = x.shape
    assert C == 7, "conv1 expects 7 input channels"
    k, s, pd = 3, 2, 3

    # Shapes the original module produces.
    conv_out = [(d + 2 * pd - k) // s + 1 for d in (D, H, W)]   # e.g. 10
    max_out = [(c + 2 - 3) // 2 + 1 for c in conv_out]          # e.g. 5
    avg_out = [(m - 3) // 3 + 1 for m in max_out]               # e.g. 1
    src = s * (DN - 1) + k - pd                                 # source rows needed (=10)
    assert all(a == 1 for a in avg_out) and all(c >= DN for c in conv_out) \
        and all(d >= src for d in (D, H, W)), \
        "kernel is specialised to the module's 1x1x1 avg-pooled head"
    nc = params["fc2_w"].shape[1]
    assert nc <= NCP

    # ---- im2col, channels-last, only the DN^3 region the pools consume -----
    span = s * (DN - 1) + 1                                     # 11
    x_cl = jnp.transpose(x[:, :, :src, :src, :src], (0, 2, 3, 4, 1))   # (N,10,10,10,C)
    x_p = jnp.pad(x_cl, ((0, 0), (pd, 0), (pd, 0), (pd, 0), (0, 0)))   # (N,13,13,13,C)
    cols = []
    for kd in range(k):
        for kh in range(k):
            for kw in range(k):
                cols.append(x_p[:, kd:kd + span:s, kh:kh + span:s,
                                kw:kw + span:s, :])             # (N,6,6,6,C)
    K = C * k * k * k                                           # 189
    patches = jnp.concatenate(cols, axis=-1).reshape(N, P6, K)  # feat = (kd*9+kh*3+kw)*C+ci
    patches = jnp.pad(patches.astype(jnp.bfloat16),
                      ((0, 0), (0, 0), (0, KPAD - K)))          # (N, 216, 256)

    # ---- fold / pad parameters ---------------------------------------------
    w_mat = jnp.transpose(params["conv_w"], (2, 3, 4, 1, 0)).reshape(K, COUT)
    w_mat = jnp.pad(w_mat.astype(jnp.bfloat16), ((0, KPAD - K), (0, 0)))   # (256, 64)
    scale = params["bn_gamma"] / jnp.sqrt(params["bn_var"] + EPS)
    shift = params["bn_beta"] - params["bn_mean"] * scale
    scale = scale.reshape(1, COUT).astype(jnp.float32)
    shift = shift.reshape(1, COUT).astype(jnp.float32)
    fc_w = params["fc_w"].astype(jnp.bfloat16)                             # (64, 512)
    fc_b = params["fc_b"].reshape(1, 512).astype(jnp.float32)
    fc2_w = jnp.pad(params["fc2_w"].astype(jnp.bfloat16),
                    ((0, 0), (0, NCP - nc)))                               # (512, 128)
    fc2_b = jnp.pad(params["fc2_b"], (0, NCP - nc)).reshape(1, NCP)
    fc2_b = fc2_b.astype(jnp.float32)

    x_padded, x1 = pl.pallas_call(
        fused_forward_kernel,
        out_shape=(jax.ShapeDtypeStruct((N, 1, NCP), jnp.float32),
                   jax.ShapeDtypeStruct((N, 1, 512), jnp.float32)),
        grid=(N,),
        in_specs=[
            pl.BlockSpec((1, P6, KPAD), lambda n: (n, 0, 0)),
            pl.BlockSpec((KPAD, COUT), lambda n: (0, 0)),
            pl.BlockSpec((1, COUT), lambda n: (0, 0)),
            pl.BlockSpec((1, COUT), lambda n: (0, 0)),
            pl.BlockSpec((COUT, 512), lambda n: (0, 0)),
            pl.BlockSpec((1, 512), lambda n: (0, 0)),
            pl.BlockSpec((512, NCP), lambda n: (0, 0)),
            pl.BlockSpec((1, NCP), lambda n: (0, 0)),
        ],
        out_specs=(pl.BlockSpec((1, 1, NCP), lambda n: (n, 0, 0)),
                   pl.BlockSpec((1, 1, 512), lambda n: (n, 0, 0))),
        compiler_params=pltpu.CompilerParams(
            dimension_semantics=("parallel",)),
    )(patches, w_mat, scale, shift, fc_w, fc_b, fc2_w, fc2_b)

    return [x_padded[:, 0, :nc], x1[:, 0, :]]


# ---------------------------------------------------------------------------
# Pure-JAX f32 reference (full conv / pools), for correctness check only.
# ---------------------------------------------------------------------------
def reference_forward(x, params):
    y = lax.conv_general_dilated(
        x, params["conv_w"], window_strides=(2, 2, 2),
        padding=[(3, 3), (3, 3), (3, 3)],
        dimension_numbers=("NCDHW", "OIDHW", "NCDHW"))
    scale = params["bn_gamma"] / jnp.sqrt(params["bn_var"] + EPS)
    shift = params["bn_beta"] - params["bn_mean"] * scale
    y = y * scale[None, :, None, None, None] + shift[None, :, None, None, None]
    y = jnp.maximum(y, 0.0)
    y = lax.reduce_window(y, -jnp.inf, lax.max, (1, 1, 3, 3, 3), (1, 1, 2, 2, 2),
                          [(0, 0), (0, 0), (1, 1), (1, 1), (1, 1)])
    y = lax.reduce_window(y, 0.0, lax.add, (1, 1, 3, 3, 3), (1, 1, 3, 3, 3),
                          [(0, 0)] * 5) / 27.0
    y = y.reshape(y.shape[0], -1)
    x1 = y @ params["fc_w"] + params["fc_b"]
    x_out = x1 @ params["fc2_w"] + params["fc2_b"]
    return x_out, x1


if __name__ == "__main__":
    key = jax.random.PRNGKey(0)
    kx, k1, k2, k3, k4, k5 = jax.random.split(key, 6)

    # module-consistent shapes: N=2, C_in=7 (conv1 requires 7), spatial=16
    x = jax.random.normal(kx, (2, 7, 16, 16, 16), jnp.float32)

    params = {
        "conv_w": jax.random.normal(k1, (64, 7, 3, 3, 3), jnp.float32)
                  * math.sqrt(2.0 / (7 * 27)),
        "bn_gamma": jnp.ones((64,), jnp.float32),     # per module init
        "bn_beta": jnp.zeros((64,), jnp.float32),
        "bn_mean": jnp.zeros((64,), jnp.float32),
        "bn_var": jnp.ones((64,), jnp.float32),
        "fc_w": jax.random.normal(k2, (64, 512), jnp.float32) / math.sqrt(64.0),
        "fc_b": jax.random.normal(k3, (512,), jnp.float32) * 0.01,
        "fc2_w": jax.random.normal(k4, (512, 2), jnp.float32) / math.sqrt(512.0),
        "fc2_b": jax.random.normal(k5, (2,), jnp.float32) * 0.01,
    }

    forward = jax.jit(resnet_l0_forward)
    out, out1 = forward(x, params)
    jax.block_until_ready(out)
    jax.block_until_ready(out1)

    ref_out, ref_out1 = reference_forward(x, params)
    # Tolerances account for bf16 MXU operands (f32 accumulation) vs f32 reference.
    np.testing.assert_allclose(np.asarray(out1), np.asarray(ref_out1),
                               rtol=2e-2, atol=5e-2)
    np.testing.assert_allclose(np.asarray(out), np.asarray(ref_out),
                               rtol=2e-2, atol=5e-2)

    assert out.shape == (2, 2) and out1.shape == (2, 512)
    print("KERNEL_OK")
</pallas_src>

<mosaic_0001>
module attributes {stable_mosaic.version = 11 : i64} {
  func.func @fused_forward_kernel(%arg0: i32, %arg1: memref<1x216x256xbf16, #tpu.memory_space<vmem>>, %arg2: memref<256x64xbf16, #tpu.memory_space<vmem>>, %arg3: memref<1x64xf32, #tpu.memory_space<vmem>>, %arg4: memref<1x64xf32, #tpu.memory_space<vmem>>, %arg5: memref<64x512xbf16, #tpu.memory_space<vmem>>, %arg6: memref<1x512xf32, #tpu.memory_space<vmem>>, %arg7: memref<512x128xbf16, #tpu.memory_space<vmem>>, %arg8: memref<1x128xf32, #tpu.memory_space<vmem>>, %arg9: memref<1x1x128xf32, #tpu.memory_space<vmem>>, %arg10: memref<1x1x512xf32, #tpu.memory_space<vmem>>) attributes {dimension_semantics = [#tpu.dimension_semantics<parallel>], iteration_bounds = array<i64: 2>, scalar_prefetch = 0 : i64, scratch_operands = 0 : i64, tpu.core_type = #tpu.core_type<tc>, window_params = [{transform_indices = @transform_0, window_bounds = array<i64: 1, 216, 256>}, {pipeline_mode = #tpu.pipeline_mode<synchronous>, transform_indices = @transform_1, window_bounds = array<i64: 256, 64>}, {pipeline_mode = #tpu.pipeline_mode<synchronous>, transform_indices = @transform_2, window_bounds = array<i64: 1, 64>}, {pipeline_mode = #tpu.pipeline_mode<synchronous>, transform_indices = @transform_3, window_bounds = array<i64: 1, 64>}, {pipeline_mode = #tpu.pipeline_mode<synchronous>, transform_indices = @transform_4, window_bounds = array<i64: 64, 512>}, {pipeline_mode = #tpu.pipeline_mode<synchronous>, transform_indices = @transform_5, window_bounds = array<i64: 1, 512>}, {pipeline_mode = #tpu.pipeline_mode<synchronous>, transform_indices = @transform_6, window_bounds = array<i64: 512, 128>}, {pipeline_mode = #tpu.pipeline_mode<synchronous>, transform_indices = @transform_7, window_bounds = array<i64: 1, 128>}, {transform_indices = @transform_8, window_bounds = array<i64: 1, 1, 128>}, {transform_indices = @transform_9, window_bounds = array<i64: 1, 1, 512>}]} {
    %c0 = arith.constant 0 : index
    %c0_0 = arith.constant 0 : index
    %c0_1 = arith.constant 0 : index
    %0 = vector.load %arg1[%c0, %c0_0, %c0_1] : memref<1x216x256xbf16, #tpu.memory_space<vmem>>, vector<1x216x256xbf16>
    %1 = vector.shape_cast %0 : vector<1x216x256xbf16> to vector<216x256xbf16>
    %c0_2 = arith.constant 0 : index
    %c0_3 = arith.constant 0 : index
    %2 = vector.load %arg2[%c0_2, %c0_3] : memref<256x64xbf16, #tpu.memory_space<vmem>>, vector<256x64xbf16>
    %cst = arith.constant dense<0.000000e+00> : vector<216x64xf32>
    %3 = tpu.matmul %1, %2, %cst {dimension_numbers = #tpu.dot_dimension_numbers<[1], [0], [0], [1], [0, 0, 1, 1], [], []>} : vector<216x256xbf16>, vector<256x64xbf16>, vector<216x64xf32> -> vector<216x64xf32>
    %c0_4 = arith.constant 0 : index
    %c0_5 = arith.constant 0 : index
    %4 = vector.load %arg3[%c0_4, %c0_5] : memref<1x64xf32, #tpu.memory_space<vmem>>, vector<1x64xf32>
    %5 = vector.broadcast %4 : vector<1x64xf32> to vector<216x64xf32>
    %6 = arith.mulf %3, %5 : vector<216x64xf32>
    %c0_6 = arith.constant 0 : index
    %c0_7 = arith.constant 0 : index
    %7 = vector.load %arg4[%c0_6, %c0_7] : memref<1x64xf32, #tpu.memory_space<vmem>>, vector<1x64xf32>
    %8 = vector.broadcast %7 : vector<1x64xf32> to vector<216x64xf32>
    %9 = arith.addf %6, %8 : vector<216x64xf32>
    %cst_8 = arith.constant 0.000000e+00 : f32
    %10 = vector.broadcast %cst_8 : f32 to vector<216x64xf32>
    %11 = arith.maximumf %9, %10 : vector<216x64xf32>
    %12 = vector.shape_cast %11 : vector<216x64xf32> to vector<6x6x6x64xf32>
    %13 = vector.extract_strided_slice %12 {offsets = [0, 0, 0, 0], sizes = [1, 6, 6, 64], strides = [1, 1, 1, 1]} : vector<6x6x6x64xf32> to vector<1x6x6x64xf32>
    %14 = vector.shape_cast %13 : vector<1x6x6x64xf32> to vector<6x6x64xf32>
    %15 = vector.extract_strided_slice %12 {offsets = [1, 0, 0, 0], sizes = [1, 6, 6, 64], strides = [1, 1, 1, 1]} : vector<6x6x6x64xf32> to vector<1x6x6x64xf32>
    %16 = vector.shape_cast %15 : vector<1x6x6x64xf32> to vector<6x6x64xf32>
    %17 = arith.maximumf %14, %16 : vector<6x6x64xf32>
    %18 = vector.extract_strided_slice %12 {offsets = [1, 0, 0, 0], sizes = [1, 6, 6, 64], strides = [1, 1, 1, 1]} : vector<6x6x6x64xf32> to vector<1x6x6x64xf32>
    %19 = vector.shape_cast %18 : vector<1x6x6x64xf32> to vector<6x6x64xf32>
    %20 = vector.extract_strided_slice %12 {offsets = [2, 0, 0, 0], sizes = [1, 6, 6, 64], strides = [1, 1, 1, 1]} : vector<6x6x6x64xf32> to vector<1x6x6x64xf32>
    %21 = vector.shape_cast %20 : vector<1x6x6x64xf32> to vector<6x6x64xf32>
    %22 = arith.maximumf %19, %21 : vector<6x6x64xf32>
    %23 = vector.extract_strided_slice %12 {offsets = [3, 0, 0, 0], sizes = [1, 6, 6, 64], strides = [1, 1, 1, 1]} : vector<6x6x6x64xf32> to vector<1x6x6x64xf32>
    %24 = vector.shape_cast %23 : vector<1x6x6x64xf32> to vector<6x6x64xf32>
    %25 = arith.maximumf %22, %24 : vector<6x6x64xf32>
    %26 = vector.extract_strided_slice %12 {offsets = [3, 0, 0, 0], sizes = [1, 6, 6, 64], strides = [1, 1, 1, 1]} : vector<6x6x6x64xf32> to vector<1x6x6x64xf32>
    %27 = vector.shape_cast %26 : vector<1x6x6x64xf32> to vector<6x6x64xf32>
    %28 = vector.extract_strided_slice %12 {offsets = [4, 0, 0, 0], sizes = [1, 6, 6, 64], strides = [1, 1, 1, 1]} : vector<6x6x6x64xf32> to vector<1x6x6x64xf32>
    %29 = vector.shape_cast %28 : vector<1x6x6x64xf32> to vector<6x6x64xf32>
    %30 = arith.maximumf %27, %29 : vector<6x6x64xf32>
    %31 = vector.extract_strided_slice %12 {offsets = [5, 0, 0, 0], sizes = [1, 6, 6, 64], strides = [1, 1, 1, 1]} : vector<6x6x6x64xf32> to vector<1x6x6x64xf32>
    %32 = vector.shape_cast %31 : vector<1x6x6x64xf32> to vector<6x6x64xf32>
    %33 = arith.maximumf %30, %32 : vector<6x6x64xf32>
    %34 = vector.shape_cast %17 : vector<6x6x64xf32> to vector<1x6x6x64xf32>
    %35 = vector.shape_cast %25 : vector<6x6x64xf32> to vector<1x6x6x64xf32>
    %36 = vector.shape_cast %33 : vector<6x6x64xf32> to vector<1x6x6x64xf32>
    %37 = tpu.concatenate %34, %35, %36 in 0 : vector<1x6x6x64xf32>, vector<1x6x6x64xf32>, vector<1x6x6x64xf32> -> vector<3x6x6x64xf32>
    %38 = vector.extract_strided_slice %37 {offsets = [0, 0, 0, 0], sizes = [3, 1, 6, 64], strides = [1, 1, 1, 1]} : vector<3x6x6x64xf32> to vector<3x1x6x64xf32>
    %39 = vector.shape_cast %38 : vector<3x1x6x64xf32> to vector<3x6x64xf32>
    %40 = vector.extract_strided_slice %37 {offsets = [0, 1, 0, 0], sizes = [3, 1, 6, 64], strides = [1, 1, 1, 1]} : vector<3x6x6x64xf32> to vector<3x1x6x64xf32>
    %41 = vector.shape_cast %40 : vector<3x1x6x64xf32> to vector<3x6x64xf32>
    %42 = arith.maximumf %39, %41 : vector<3x6x64xf32>
    %43 = vector.extract_strided_slice %37 {offsets = [0, 1, 0, 0], sizes = [3, 1, 6, 64], strides = [1, 1, 1, 1]} : vector<3x6x6x64xf32> to vector<3x1x6x64xf32>
    %44 = vector.shape_cast %43 : vector<3x1x6x64xf32> to vector<3x6x64xf32>
    %45 = vector.extract_strided_slice %37 {offsets = [0, 2, 0, 0], sizes = [3, 1, 6, 64], strides = [1, 1, 1, 1]} : vector<3x6x6x64xf32> to vector<3x1x6x64xf32>
    %46 = vector.shape_cast %45 : vector<3x1x6x64xf32> to vector<3x6x64xf32>
    %47 = arith.maximumf %44, %46 : vector<3x6x64xf32>
    %48 = vector.extract_strided_slice %37 {offsets = [0, 3, 0, 0], sizes = [3, 1, 6, 64], strides = [1, 1, 1, 1]} : vector<3x6x6x64xf32> to vector<3x1x6x64xf32>
    %49 = vector.shape_cast %48 : vector<3x1x6x64xf32> to vector<3x6x64xf32>
    %50 = arith.maximumf %47, %49 : vector<3x6x64xf32>
    %51 = vector.extract_strided_slice %37 {offsets = [0, 3, 0, 0], sizes = [3, 1, 6, 64], strides = [1, 1, 1, 1]} : vector<3x6x6x64xf32> to vector<3x1x6x64xf32>
    %52 = vector.shape_cast %51 : vector<3x1x6x64xf32> to vector<3x6x64xf32>
    %53 = vector.extract_strided_slice %37 {offsets = [0, 4, 0, 0], sizes = [3, 1, 6, 64], strides = [1, 1, 1, 1]} : vector<3x6x6x64xf32> to vector<3x1x6x64xf32>
    %54 = vector.shape_cast %53 : vector<3x1x6x64xf32> to vector<3x6x64xf32>
    %55 = arith.maximumf %52, %54 : vector<3x6x64xf32>
    %56 = vector.extract_strided_slice %37 {offsets = [0, 5, 0, 0], sizes = [3, 1, 6, 64], strides = [1, 1, 1, 1]} : vector<3x6x6x64xf32> to vector<3x1x6x64xf32>
    %57 = vector.shape_cast %56 : vector<3x1x6x64xf32> to vector<3x6x64xf32>
    %58 = arith.maximumf %55, %57 : vector<3x6x64xf32>
    %59 = vector.shape_cast %42 : vector<3x6x64xf32> to vector<1x3x6x64xf32>
    %60 = vector.shape_cast %50 : vector<3x6x64xf32> to vector<1x3x6x64xf32>
    %61 = vector.shape_cast %58 : vector<3x6x64xf32> to vector<1x3x6x64xf32>
    %62 = tpu.concatenate %59, %60, %61 in 0 : vector<1x3x6x64xf32>, vector<1x3x6x64xf32>, vector<1x3x6x64xf32> -> vector<3x3x6x64xf32>
    %63 = vector.extract_strided_slice %62 {offsets = [0, 0, 0, 0], sizes = [3, 3, 1, 64], strides = [1, 1, 1, 1]} : vector<3x3x6x64xf32> to vector<3x3x1x64xf32>
    %64 = vector.shape_cast %63 : vector<3x3x1x64xf32> to vector<3x3x64xf32>
    %65 = vector.extract_strided_slice %62 {offsets = [0, 0, 1, 0], sizes = [3, 3, 1, 64], strides = [1, 1, 1, 1]} : vector<3x3x6x64xf32> to vector<3x3x1x64xf32>
    %66 = vector.shape_cast %65 : vector<3x3x1x64xf32> to vector<3x3x64xf32>
    %67 = arith.maximumf %64, %66 : vector<3x3x64xf32>
    %68 = vector.extract_strided_slice %62 {offsets = [0, 0, 1, 0], sizes = [3, 3, 1, 64], strides = [1, 1, 1, 1]} : vector<3x3x6x64xf32> to vector<3x3x1x64xf32>
    %69 = vector.shape_cast %68 : vector<3x3x1x64xf32> to vector<3x3x64xf32>
    %70 = vector.extract_strided_slice %62 {offsets = [0, 0, 2, 0], sizes = [3, 3, 1, 64], strides = [1, 1, 1, 1]} : vector<3x3x6x64xf32> to vector<3x3x1x64xf32>
    %71 = vector.shape_cast %70 : vector<3x3x1x64xf32> to vector<3x3x64xf32>
    %72 = arith.maximumf %69, %71 : vector<3x3x64xf32>
    %73 = vector.extract_strided_slice %62 {offsets = [0, 0, 3, 0], sizes = [3, 3, 1, 64], strides = [1, 1, 1, 1]} : vector<3x3x6x64xf32> to vector<3x3x1x64xf32>
    %74 = vector.shape_cast %73 : vector<3x3x1x64xf32> to vector<3x3x64xf32>
    %75 = arith.maximumf %72, %74 : vector<3x3x64xf32>
    %76 = vector.extract_strided_slice %62 {offsets = [0, 0, 3, 0], sizes = [3, 3, 1, 64], strides = [1, 1, 1, 1]} : vector<3x3x6x64xf32> to vector<3x3x1x64xf32>
    %77 = vector.shape_cast %76 : vector<3x3x1x64xf32> to vector<3x3x64xf32>
    %78 = vector.extract_strided_slice %62 {offsets = [0, 0, 4, 0], sizes = [3, 3, 1, 64], strides = [1, 1, 1, 1]} : vector<3x3x6x64xf32> to vector<3x3x1x64xf32>
    %79 = vector.shape_cast %78 : vector<3x3x1x64xf32> to vector<3x3x64xf32>
    %80 = arith.maximumf %77, %79 : vector<3x3x64xf32>
    %81 = vector.extract_strided_slice %62 {offsets = [0, 0, 5, 0], sizes = [3, 3, 1, 64], strides = [1, 1, 1, 1]} : vector<3x3x6x64xf32> to vector<3x3x1x64xf32>
    %82 = vector.shape_cast %81 : vector<3x3x1x64xf32> to vector<3x3x64xf32>
    %83 = arith.maximumf %80, %82 : vector<3x3x64xf32>
    %84 = arith.addf %67, %75 : vector<3x3x64xf32>
    %85 = arith.addf %84, %83 : vector<3x3x64xf32>
    %86 = vector.shape_cast %85 : vector<3x3x64xf32> to vector<9x64xf32>
    %cst_9 = arith.constant dense<0.000000e+00> : vector<64xf32>
    %87 = vector.multi_reduction <add>, %86, %cst_9 [0] : vector<9x64xf32> to vector<64xf32>
    %88 = vector.shape_cast %87 : vector<64xf32> to vector<1x64xf32>
    %cst_10 = arith.constant 0.0370370373 : f32
    %89 = vector.broadcast %cst_10 : f32 to vector<1x64xf32>
    %90 = arith.mulf %88, %89 : vector<1x64xf32>
    %91 = arith.truncf %90 : vector<1x64xf32> to vector<1x64xbf16>
    %c0_11 = arith.constant 0 : index
    %c0_12 = arith.constant 0 : index
    %92 = vector.load %arg5[%c0_11, %c0_12] : memref<64x512xbf16, #tpu.memory_space<vmem>>, vector<64x512xbf16>
    %cst_13 = arith.constant dense<0.000000e+00> : vector<1x512xf32>
    %93 = tpu.matmul %91, %92, %cst_13 {dimension_numbers = #tpu.dot_dimension_numbers<[1], [0], [0], [1], [0, 0, 1, 1], [], []>} : vector<1x64xbf16>, vector<64x512xbf16>, vector<1x512xf32> -> vector<1x512xf32>
    %c0_14 = arith.constant 0 : index
    %c0_15 = arith.constant 0 : index
    %94 = vector.load %arg6[%c0_14, %c0_15] : memref<1x512xf32, #tpu.memory_space<vmem>>, vector<1x512xf32>
    %95 = arith.addf %93, %94 : vector<1x512xf32>
    %96 = arith.truncf %95 : vector<1x512xf32> to vector<1x512xbf16>
    %c0_16 = arith.constant 0 : index
    %c0_17 = arith.constant 0 : index
    %97 = vector.load %arg7[%c0_16, %c0_17] : memref<512x128xbf16, #tpu.memory_space<vmem>>, vector<512x128xbf16>
    %cst_18 = arith.constant dense<0.000000e+00> : vector<1x128xf32>
    %98 = tpu.matmul %96, %97, %cst_18 {dimension_numbers = #tpu.dot_dimension_numbers<[1], [0], [0], [1], [0, 0, 1, 1], [], []>} : vector<1x512xbf16>, vector<512x128xbf16>, vector<1x128xf32> -> vector<1x128xf32>
    %c0_19 = arith.constant 0 : index
    %c0_20 = arith.constant 0 : index
    %99 = vector.load %arg8[%c0_19, %c0_20] : memref<1x128xf32, #tpu.memory_space<vmem>>, vector<1x128xf32>
    %100 = arith.addf %98, %99 : vector<1x128xf32>
    %c0_21 = arith.constant 0 : index
    %c0_22 = arith.constant 0 : index
    %c0_23 = arith.constant 0 : index
    %101 = vector.load %arg10[%c0_21, %c0_22, %c0_23] : memref<1x1x512xf32, #tpu.memory_space<vmem>>, vector<1x1x512xf32>
    %102 = vector.shape_cast %101 : vector<1x1x512xf32> to vector<1x512xf32>
    %103 = vector.shape_cast %95 : vector<1x512xf32> to vector<1x1x512xf32>
    tpu.vector_store %arg10[%c0_21, %c0_22, %c0_23], %103 {strides = array<i32>} : memref<1x1x512xf32, #tpu.memory_space<vmem>>, vector<1x1x512xf32>,
    %c0_24 = arith.constant 0 : index
    %c0_25 = arith.constant 0 : index
    %c0_26 = arith.constant 0 : index
    %104 = vector.load %arg9[%c0_24, %c0_25, %c0_26] : memref<1x1x128xf32, #tpu.memory_space<vmem>>, vector<1x1x128xf32>
    %105 = vector.shape_cast %104 : vector<1x1x128xf32> to vector<1x128xf32>
    %106 = vector.shape_cast %100 : vector<1x128xf32> to vector<1x1x128xf32>
    tpu.vector_store %arg9[%c0_24, %c0_25, %c0_26], %106 {strides = array<i32>} : memref<1x1x128xf32, #tpu.memory_space<vmem>>, vector<1x1x128xf32>,
    return
  }
  func.func @transform_0(%arg0: i32) -> (i32, i32, i32) {
    %c0_i32 = arith.constant 0 : i32
    %c0_i32_0 = arith.constant 0 : i32
    %c0_i32_1 = arith.constant 0 : i32
    return %arg0, %c0_i32, %c0_i32_0 : i32, i32, i32
  }
  func.func @transform_1(%arg0: i32) -> (i32, i32) {
    %c0_i32 = arith.constant 0 : i32
    %c0_i32_0 = arith.constant 0 : i32
    %c0_i32_1 = arith.constant 0 : i32
    return %c0_i32, %c0_i32_0 : i32, i32
  }
  func.func @transform_2(%arg0: i32) -> (i32, i32) {
    %c0_i32 = arith.constant 0 : i32
    %c0_i32_0 = arith.constant 0 : i32
    %c0_i32_1 = arith.constant 0 : i32
    return %c0_i32, %c0_i32_0 : i32, i32
  }
  func.func @transform_3(%arg0: i32) -> (i32, i32) {
    %c0_i32 = arith.constant 0 : i32
    %c0_i32_0 = arith.constant 0 : i32
    %c0_i32_1 = arith.constant 0 : i32
    return %c0_i32, %c0_i32_0 : i32, i32
  }
  func.func @transform_4(%arg0: i32) -> (i32, i32) {
    %c0_i32 = arith.constant 0 : i32
    %c0_i32_0 = arith.constant 0 : i32
    %c0_i32_1 = arith.constant 0 : i32
    return %c0_i32, %c0_i32_0 : i32, i32
  }
  func.func @transform_5(%arg0: i32) -> (i32, i32) {
    %c0_i32 = arith.constant 0 : i32
    %c0_i32_0 = arith.constant 0 : i32
    %c0_i32_1 = arith.constant 0 : i32
    return %c0_i32, %c0_i32_0 : i32, i32
  }
  func.func @transform_6(%arg0: i32) -> (i32, i32) {
    %c0_i32 = arith.constant 0 : i32
    %c0_i32_0 = arith.constant 0 : i32
    %c0_i32_1 = arith.constant 0 : i32
    return %c0_i32, %c0_i32_0 : i32, i32
  }
  func.func @transform_7(%arg0: i32) -> (i32, i32) {
    %c0_i32 = arith.constant 0 : i32
    %c0_i32_0 = arith.constant 0 : i32
    %c0_i32_1 = arith.constant 0 : i32
    return %c0_i32, %c0_i32_0 : i32, i32
  }
  func.func @transform_8(%arg0: i32) -> (i32, i32, i32) {
    %c0_i32 = arith.constant 0 : i32
    %c0_i32_0 = arith.constant 0 : i32
    %c0_i32_1 = arith.constant 0 : i32
    return %arg0, %c0_i32, %c0_i32_0 : i32, i32, i32
  }
  func.func @transform_9(%arg0: i32) -> (i32, i32, i32) {
    %c0_i32 = arith.constant 0 : i32
    %c0_i32_0 = arith.constant 0 : i32
    %c0_i32_1 = arith.constant 0 : i32
    return %arg0, %c0_i32, %c0_i32_0 : i32, i32, i32
  }
}

</mosaic_0001>

<llo_original>
// kernel: resnet_l0_forward.1
$region0: #{resnet_l0_forward.1}
  #allocation0 [shape = 'u32[]', space=smem, size = 0x4, offset = 0x4, fixed_abs, tag = 'smem constant byte address 0x4 - core index']
  #allocation1 [shape = 'u32[144,128]{1,0:T(1,128)}', space=vmem, size = 0x12000, scoped, tag = 'internal scratch']
  %s0 = inlined_call_operand.vmem [shape: bf16[2,216,256], index: 0, kind: input, shape index: {}]
  %s1 = inlined_call_operand.vmem [shape: bf16[256,64], index: 1, kind: input, shape index: {}]
  %s2 = inlined_call_operand.vmem [shape: f32[1,64], index: 2, kind: input, shape index: {}]
  %s3 = inlined_call_operand.vmem [shape: f32[1,64], index: 3, kind: input, shape index: {}]
  %s4 = inlined_call_operand.vmem [shape: bf16[64,512], index: 4, kind: input, shape index: {}]
  %s5 = inlined_call_operand.vmem [shape: f32[1,512], index: 5, kind: input, shape index: {}]
  %s6 = inlined_call_operand.vmem [shape: bf16[512,128], index: 6, kind: input, shape index: {}]
  %s7 = inlined_call_operand.vmem [shape: f32[1,128], index: 7, kind: input, shape index: {}]
  %s8 = inlined_call_operand.hbm [shape: f32[2,1,128], index: 8, kind: output, shape index: {0}]
  %s9 = inlined_call_operand.vmem [shape: f32[2,1,512], index: 9, kind: output, shape index: {1}]
  %10 = xla_tuple %s8, %s9
  %s11 = sld [smem:[#allocation0]]
  $region73: #{resnet_l0_forward.1} parent=0
    _
  %s13 = ssub.s32 1, %s11
  %s14 = scalar_select 0, %s13, %s11
  $region1: #{resnet_l0_forward.1} parent=0
    #allocation2 [shape = 'u8[1024]{0}', space=vmem, size = 0x400, scoped, tag = 'output window, operand 0']
    #allocation3 [shape = 's32[2]{0}', space=sflag, size = 0x8, scoped, tag = 'scoped memory for resnet_l0_forward.1']
    %15 = vsyncpa [#allocation3], 0
    %s16 = scalar_lea.sflag [#allocation3], 1
    %17 = vsyncpa %s16, 0
    loop: start=0, step=1, limit=4
    $region2: #{resnet_l0_forward.1} parent=1 // loop_pre_header
      _
    $region3: #{resnet_l0_forward.1} parent=1 // loop_header
      %s19 = sphi 0, %s23
      %p20 = scmp.ge.s32.totalorder %s19, 4
      %s29 = sphi 0, %s31
      %s32 = sphi 0, %s29
      %s33 = sphi 0, %s32
      %s49 = sphi 0, %s33
      %s53 = sphi 0, %s53
      %s55 = sphi 0, %s53
      %s56 = sphi 0, %s55
      %s70 = sphi 0, %s56
      %s74 = sphi 0, %s74
      %s76 = sphi 0, %s74
      %s77 = sphi 0, %s76
      %s91 = sphi 0, %s77
      %s95 = sphi 0, %s95
      %s97 = sphi 0, %s95
      %s98 = sphi 0, %s97
      %s112 = sphi 0, %s98
      %s116 = sphi 0, %s116
      %s118 = sphi 0, %s116
      %s119 = sphi 0, %s118
      %s133 = sphi 0, %s119
      %s137 = sphi 0, %s137
      %s139 = sphi 0, %s137
      %s140 = sphi 0, %s139
      %s154 = sphi 0, %s140
      %s158 = sphi 0, %s158
      %s160 = sphi 0, %s158
      %s161 = sphi 0, %s160
      %s175 = sphi 0, %s161
      %s179 = sphi 0, %s179
      %s181 = sphi 0, %s179
      %s182 = sphi 0, %s181
      %s196 = sphi 0, %s182
      %s202 = sphi 0, %s204
      %s205 = sphi 0, %s202
      %s206 = sphi 0, %s205
      %s222 = sphi 0, %s206
      %s228 = sphi 0, %s230
      %s231 = sphi 0, %s228
      %s232 = sphi 0, %s231
      %s248 = sphi 0, %s232
    $region4: #{resnet_l0_forward.1} parent=1 // loop_header_branch
      %22 = sbr.rel (%p20) target = $region8
    $region5: #{resnet_l0_forward.1} parent=1 // loop_body
      %s24 = ssub.s32 %s19, 1
      %s25 = ssub.s32 %s19, 2
      %s26 = sadd.s32 %s19, 1
      %s27 = ssub.s32 %s19, %s26
      %p28 = scmp.eq.s32.totalorder %s27, 0
      %s30 = sadd.s32 %s29, 1
      %s31 = scalar_select %p28, %s29, %s30
      %p34 = pneg %p28
      %p35 = scmp.eq.s32.totalorder %s19, 1
      %p36 = por %p34, %p35
      %p37 = scmp.ne.s32.totalorder %s29, %s32
      %p38 = scmp.eq.s32.totalorder %s19, 0
      %p39 = por %p37, %p38
      %p40 = scmp.ne.s32.totalorder %s29, %s32
      %p41 = scmp.eq.s32.totalorder %s24, 1
      %p42 = por %p40, %p41
      %p43 = scmp.ne.s32.totalorder %s32, %s33
      %p44 = scmp.eq.s32.totalorder %s24, 0
      %p45 = por %p43, %p44
      %p46 = scmp.ne.s32.totalorder %s32, %s33
      %p47 = scmp.eq.s32.totalorder %s25, 1
      %p48 = por %p46, %p47
      %p50 = scmp.ne.s32.totalorder %s33, %s49
      %p51 = scmp.eq.s32.totalorder %s25, 0
      %p52 = por %p50, %p51
      %s54 = sadd.s32 %s53, 1
      %p57 = scmp.eq.s32.totalorder %s19, 1
      %p58 = scmp.ne.s32.totalorder %s53, %s55
      %p59 = scmp.eq.s32.totalorder %s19, 0
      %p60 = por %p58, %p59
      %p61 = scmp.ne.s32.totalorder %s53, %s55
      %p62 = scmp.eq.s32.totalorder %s24, 1
      %p63 = por %p61, %p62
      %p64 = scmp.ne.s32.totalorder %s55, %s56
      %p65 = scmp.eq.s32.totalorder %s24, 0
      %p66 = por %p64, %p65
      %p67 = scmp.ne.s32.totalorder %s55, %s56
      %p68 = scmp.eq.s32.totalorder %s25, 1
      %p69 = por %p67, %p68
      %p71 = scmp.ne.s32.totalorder %s56, %s70
      %p72 = scmp.eq.s32.totalorder %s25, 0
      %p73 = por %p71, %p72
      %s75 = sadd.s32 %s74, 1
      %p78 = scmp.eq.s32.totalorder %s19, 1
      %p79 = scmp.ne.s32.totalorder %s74, %s76
      %p80 = scmp.eq.s32.totalorder %s19, 0
      %p81 = por %p79, %p80
      %p82 = scmp.ne.s32.totalorder %s74, %s76
      %p83 = scmp.eq.s32.totalorder %s24, 1
      %p84 = por %p82, %p83
      %p85 = scmp.ne.s32.totalorder %s76, %s77
      %p86 = scmp.eq.s32.totalorder %s24, 0
      %p87 = por %p85, %p86
      %p88 = scmp.ne.s32.totalorder %s76, %s77
      %p89 = scmp.eq.s32.totalorder %s25, 1
      %p90 = por %p88, %p89
      %p92 = scmp.ne.s32.totalorder %s77, %s91
      %p93 = scmp.eq.s32.totalorder %s25, 0
      %p94 = por %p92, %p93
      %s96 = sadd.s32 %s95, 1
      %p99 = scmp.eq.s32.totalorder %s19, 1
      %p100 = scmp.ne.s32.totalorder %s95, %s97
      %p101 = scmp.eq.s32.totalorder %s19, 0
      %p102 = por %p100, %p101
      %p103 = scmp.ne.s32.totalorder %s95, %s97
      %p104 = scmp.eq.s32.totalorder %s24, 1
      %p105 = por %p103, %p104
      %p106 = scmp.ne.s32.totalorder %s97, %s98
      %p107 = scmp.eq.s32.totalorder %s24, 0
      %p108 = por %p106, %p107
      %p109 = scmp.ne.s32.totalorder %s97, %s98
      %p110 = scmp.eq.s32.totalorder %s25, 1
      %p111 = por %p109, %p110
      %p113 = scmp.ne.s32.totalorder %s98, %s112
      %p114 = scmp.eq.s32.totalorder %s25, 0
      %p115 = por %p113, %p114
      %s117 = sadd.s32 %s116, 1
      %p120 = scmp.eq.s32.totalorder %s19, 1
      %p121 = scmp.ne.s32.totalorder %s116, %s118
      %p122 = scmp.eq.s32.totalorder %s19, 0
      %p123 = por %p121, %p122
      %p124 = scmp.ne.s32.totalorder %s116, %s118
      %p125 = scmp.eq.s32.totalorder %s24, 1
      %p126 = por %p124, %p125
      %p127 = scmp.ne.s32.totalorder %s118, %s119
      %p128 = scmp.eq.s32.totalorder %s24, 0
      %p129 = por %p127, %p128
      %p130 = scmp.ne.s32.totalorder %s118, %s119
      %p131 = scmp.eq.s32.totalorder %s25, 1
      %p132 = por %p130, %p131
      %p134 = scmp.ne.s32.totalorder %s119, %s133
      %p135 = scmp.eq.s32.totalorder %s25, 0
      %p136 = por %p134, %p135
      %s138 = sadd.s32 %s137, 1
      %p141 = scmp.eq.s32.totalorder %s19, 1
      %p142 = scmp.ne.s32.totalorder %s137, %s139
      %p143 = scmp.eq.s32.totalorder %s19, 0
      %p144 = por %p142, %p143
      %p145 = scmp.ne.s32.totalorder %s137, %s139
      %p146 = scmp.eq.s32.totalorder %s24, 1
      %p147 = por %p145, %p146
      %p148 = scmp.ne.s32.totalorder %s139, %s140
      %p149 = scmp.eq.s32.totalorder %s24, 0
      %p150 = por %p148, %p149
      %p151 = scmp.ne.s32.totalorder %s139, %s140
      %p152 = scmp.eq.s32.totalorder %s25, 1
      %p153 = por %p151, %p152
      %p155 = scmp.ne.s32.totalorder %s140, %s154
      %p156 = scmp.eq.s32.totalorder %s25, 0
      %p157 = por %p155, %p156
      %s159 = sadd.s32 %s158, 1
      %p162 = scmp.eq.s32.totalorder %s19, 1
      %p163 = scmp.ne.s32.totalorder %s158, %s160
      %p164 = scmp.eq.s32.totalorder %s19, 0
      %p165 = por %p163, %p164
      %p166 = scmp.ne.s32.totalorder %s158, %s160
      %p167 = scmp.eq.s32.totalorder %s24, 1
      %p168 = por %p166, %p167
      %p169 = scmp.ne.s32.totalorder %s160, %s161
      %p170 = scmp.eq.s32.totalorder %s24, 0
      %p171 = por %p169, %p170
      %p172 = scmp.ne.s32.totalorder %s160, %s161
      %p173 = scmp.eq.s32.totalorder %s25, 1
      %p174 = por %p172, %p173
      %p176 = scmp.ne.s32.totalorder %s161, %s175
      %p177 = scmp.eq.s32.totalorder %s25, 0
      %p178 = por %p176, %p177
      %s180 = sadd.s32 %s179, 1
      %p183 = scmp.eq.s32.totalorder %s19, 1
      %p184 = scmp.ne.s32.totalorder %s179, %s181
      %p185 = scmp.eq.s32.totalorder %s19, 0
      %p186 = por %p184, %p185
      %p187 = scmp.ne.s32.totalorder %s179, %s181
      %p188 = scmp.eq.s32.totalorder %s24, 1
      %p189 = por %p187, %p188
      %p190 = scmp.ne.s32.totalorder %s181, %s182
      %p191 = scmp.eq.s32.totalorder %s24, 0
      %p192 = por %p190, %p191
      %p193 = scmp.ne.s32.totalorder %s181, %s182
      %p194 = scmp.eq.s32.totalorder %s25, 1
      %p195 = por %p193, %p194
      %p197 = scmp.ne.s32.totalorder %s182, %s196
      %p198 = scmp.eq.s32.totalorder %s25, 0
      %p199 = por %p197, %p198
      %s200 = ssub.s32 %s19, %s26
      %p201 = scmp.eq.s32.totalorder %s200, 0
      %s203 = sadd.s32 %s202, 1
      %s204 = scalar_select %p201, %s202, %s203
      %p207 = pneg %p201
      %p208 = scmp.eq.s32.totalorder %s19, 1
      %p209 = por %p207, %p208
      %p210 = scmp.ne.s32.totalorder %s202, %s205
      %p211 = scmp.eq.s32.totalorder %s19, 0
      %p212 = por %p210, %p211
      %p213 = scmp.ne.s32.totalorder %s202, %s205
      %p214 = scmp.eq.s32.totalorder %s24, 1
      %p215 = por %p213, %p214
      %p216 = scmp.ne.s32.totalorder %s205, %s206
      %p217 = scmp.eq.s32.totalorder %s24, 0
      %p218 = por %p216, %p217
      %p219 = scmp.ne.s32.totalorder %s205, %s206
      %p220 = scmp.eq.s32.totalorder %s25, 1
      %p221 = por %p219, %p220
      %p223 = scmp.ne.s32.totalorder %s206, %s222
      %p224 = scmp.eq.s32.totalorder %s25, 0
      %p225 = por %p223, %p224
      %s226 = ssub.s32 %s19, %s26
      %p227 = scmp.eq.s32.totalorder %s226, 0
      %s229 = sadd.s32 %s228, 1
      %s230 = scalar_select %p227, %s228, %s229
      %p233 = pneg %p227
      %p234 = scmp.eq.s32.totalorder %s19, 1
      %p235 = por %p233, %p234
      %p236 = scmp.ne.s32.totalorder %s228, %s231
      %p237 = scmp.eq.s32.totalorder %s19, 0
      %p238 = por %p236, %p237
      %p239 = scmp.ne.s32.totalorder %s228, %s231
      %p240 = scmp.eq.s32.totalorder %s24, 1
      %p241 = por %p239, %p240
      %p242 = scmp.ne.s32.totalorder %s231, %s232
      %p243 = scmp.eq.s32.totalorder %s24, 0
      %p244 = por %p242, %p243
      %p245 = scmp.ne.s32.totalorder %s231, %s232
      %p246 = scmp.eq.s32.totalorder %s25, 1
      %p247 = por %p245, %p246
      %p249 = scmp.ne.s32.totalorder %s232, %s248
      %p250 = scmp.eq.s32.totalorder %s25, 0
      %p251 = por %p249, %p250
      %p252 = scmp.le.s32.totalorder 1, %s19
      %p253 = scmp.lt.s32.totalorder %s19, 3
      %p254 = pnand %p252, %p253
      %p255 = pneg %p254
      // Predicated region
      $region9: #{resnet_l0_forward.1} parent=5 // pred_check
        _
      $region10: #{resnet_l0_forward.1} parent=5 // pred_check_branch
        %257 = sbr.rel (%p254) target = $region12
      $region11: #{resnet_l0_forward.1} parent=5 // pred_region
        %s258 = ssub.s32 %s19, 1
        // Predicated region
        $region13: #{resnet_l0_forward.1} parent=11 // pred_check
          %p259 = pneg %p66
        $region14: #{resnet_l0_forward.1} parent=11 // pred_check_branch
          %261 = sbr.rel (%p259) target = $region16
        $region15: #{resnet_l0_forward.1} parent=11 // pred_region
          _
        $region16: #{resnet_l0_forward.1} parent=11 // pred_fallthru
          _
        // Predicated region
        $region17: #{resnet_l0_forward.1} parent=11 // pred_check
          %p262 = pneg %p87
        $region18: #{resnet_l0_forward.1} parent=11 // pred_check_branch
          %264 = sbr.rel (%p262) target = $region20
        $region19: #{resnet_l0_forward.1} parent=11 // pred_region
          _
        $region20: #{resnet_l0_forward.1} parent=11 // pred_fallthru
          _
        // Predicated region
        $region21: #{resnet_l0_forward.1} parent=11 // pred_check
          %p265 = pneg %p108
        $region22: #{resnet_l0_forward.1} parent=11 // pred_check_branch
          %267 = sbr.rel (%p265) target = $region24
        $region23: #{resnet_l0_forward.1} parent=11 // pred_region
          _
        $region24: #{resnet_l0_forward.1} parent=11 // pred_fallthru
          _
        // Predicated region
        $region25: #{resnet_l0_forward.1} parent=11 // pred_check
          %p268 = pneg %p129
        $region26: #{resnet_l0_forward.1} parent=11 // pred_check_branch
          %270 = sbr.rel (%p268) target = $region28
        $region27: #{resnet_l0_forward.1} parent=11 // pred_region
          _
        $region28: #{resnet_l0_forward.1} parent=11 // pred_fallthru
          _
        // Predicated region
        $region29: #{resnet_l0_forward.1} parent=11 // pred_check
          %p271 = pneg %p150
        $region30: #{resnet_l0_forward.1} parent=11 // pred_check_branch
          %273 = sbr.rel (%p271) target = $region32
        $region31: #{resnet_l0_forward.1} parent=11 // pred_region
          _
        $region32: #{resnet_l0_forward.1} parent=11 // pred_fallthru
          _
        // Predicated region
        $region33: #{resnet_l0_forward.1} parent=11 // pred_check
          %p274 = pneg %p171
        $region34: #{resnet_l0_forward.1} parent=11 // pred_check_branch
          %276 = sbr.rel (%p274) target = $region36
        $region35: #{resnet_l0_forward.1} parent=11 // pred_region
          _
        $region36: #{resnet_l0_forward.1} parent=11 // pred_fallthru
          _
        // Predicated region
        $region37: #{resnet_l0_forward.1} parent=11 // pred_check
          %p277 = pneg %p192
        $region38: #{resnet_l0_forward.1} parent=11 // pred_check_branch
          %279 = sbr.rel (%p277) target = $region40
        $region39: #{resnet_l0_forward.1} parent=11 // pred_region
          _
        $region40: #{resnet_l0_forward.1} parent=11 // pred_fallthru
          _
      $region12: #{resnet_l0_forward.1} parent=5 // pred_fallthru
        _
      %p280 = scmp.lt.s32.totalorder %s19, 2
      // Predicated region
      $region41: #{resnet_l0_forward.1} parent=5 // pred_check
        %p281 = pneg %p280
      $region42: #{resnet_l0_forward.1} parent=5 // pred_check_branch
        %283 = sbr.rel (%p281) target = $region44
      $region43: #{resnet_l0_forward.1} parent=5 // pred_region
        // Predicated region
        $region45: #{resnet_l0_forward.1} parent=43 // pred_check
          %p284 = pneg %p39
        $region46: #{resnet_l0_forward.1} parent=43 // pred_check_branch
          %286 = sbr.rel (%p284) target = $region48
        $region47: #{resnet_l0_forward.1} parent=43 // pred_region
          %p287 = scmp.lt.s32.totalorder %s19, 1
          %s288 = scalar_select %p287, %s19, 1
          %s289 = smul.addr %s288, 54
          %s290 = smul.addr %s289, 4
          %s291 = scalar_lea.vmem %s0, %s290
        $region48: #{resnet_l0_forward.1} parent=43 // pred_fallthru
          _
      $region44: #{resnet_l0_forward.1} parent=5 // pred_fallthru
        _
      %p292 = scmp.le.s32.totalorder 1, %s19
      %p293 = scmp.lt.s32.totalorder %s19, 3
      %p294 = pnand %p292, %p293
      %p295 = pneg %p294
      // Predicated region
      $region49: #{resnet_l0_forward.1} parent=5 // pred_check
        _
      $region50: #{resnet_l0_forward.1} parent=5 // pred_check_branch
        %297 = sbr.rel (%p294) target = $region52
      $region51: #{resnet_l0_forward.1} parent=5 // pred_region
        %s298 = ssub.s32 %s19, 1
        %p299 = scmp.lt.s32.totalorder %s24, 1
        %s300 = scalar_select %p299, %s24, 1
        %s301 = smul.addr %s300, 54
        %s302 = smul.addr %s301, 4
        %s303 = scalar_lea.vmem %s0, %s302
        %p304 = pneg %p45
        %p305 = pneg %p42
        %p306 = pneg %p66
        %p307 = pneg %p63
        %p308 = pneg %p87
        %p309 = pneg %p84
        %p310 = pneg %p108
        %p311 = pneg %p105
        %p312 = pneg %p129
        %p313 = pneg %p126
        %p314 = pneg %p150
        %p315 = pneg %p147
        %p316 = pneg %p171
        %p317 = pneg %p168
        %p318 = pneg %p192
        %p319 = pneg %p189
        %p320 = pneg %p218
        %p321 = pneg %p215
        %s322 = sand.u32 %s205, 1
        %s323 = scalar_lea.sflag [#allocation3], %s322
        %s324 = sand.u32 %s205, 1
        %s325 = scalar_lea.vmem [#allocation2], %s324
        %p326 = pneg %p244
        %p327 = pneg %p241
        %p328 = scmp.lt.s32.totalorder %s24, 1
        %s329 = scalar_select %p328, %s24, 1
        %s330 = smul.addr %s329, 4
        %s331 = scalar_lea.vmem %s9, %s330
        %p332 = scmp.lt.s32.totalorder %s24, 1
        %s333 = scalar_select %p332, %s24, 1
        %s334 = smul.addr %s333, 54
        %s335 = smul.addr %s334, 4
        %s336 = scalar_lea.vmem %s0, %s335
        %p337 = scmp.lt.s32.totalorder %s24, 1
        %s338 = scalar_select %p337, %s24, 1
        %s339 = smul.addr %s338, 4
        %s340 = scalar_lea.vmem %s9, %s339
        %v342 = vld [vmem:[%s336] sm:$0xff]
        %v343 = vld [vmem:[%s336 + $0x8] sm:$0xff]
        %v344 = vld [vmem:[%s336 + $0x10] sm:$0xff]
        %v345 = vld [vmem:[%s336 + $0x18] sm:$0xff]
        %v346 = vld [vmem:[%s336 + $0x20] sm:$0xff]
        %v347 = vld [vmem:[%s336 + $0x28] sm:$0xff]
        %v348 = vld [vmem:[%s336 + $0x30] sm:$0xff]
        %v349 = vld [vmem:[%s336 + $0x38] sm:$0xff]
        %v350 = vld [vmem:[%s336 + $0x40] sm:$0xff]
        %v351 = vld [vmem:[%s336 + $0x48] sm:$0xff]
        %v352 = vld [vmem:[%s336 + $0x50] sm:$0xff]
        %v353 = vld [vmem:[%s336 + $0x58] sm:$0xff]
        %v354 = vld [vmem:[%s336 + $0x60] sm:$0xff]
        %v355 = vld [vmem:[%s336 + $0x68] sm:$0xff]
        %v356 = vld [vmem:[%s336 + $0x70] sm:$0xff]
        %v357 = vld [vmem:[%s336 + $0x78] sm:$0xff]
        %v358 = vld [vmem:[%s336 + $0x80] sm:$0xff]
        %v359 = vld [vmem:[%s336 + $0x88] sm:$0xff]
        %v360 = vld [vmem:[%s336 + $0x90] sm:$0xff]
        %v361 = vld [vmem:[%s336 + $0x98] sm:$0xff]
        %v362 = vld [vmem:[%s336 + $0xa0] sm:$0xff]
        %v363 = vld [vmem:[%s336 + $0xa8] sm:$0xff]
        %v364 = vld [vmem:[%s336 + $0xb0] sm:$0xff]
        %v365 = vld [vmem:[%s336 + $0xb8] sm:$0xff]
        %v366 = vld [vmem:[%s336 + $0xc0] sm:$0xff]
        %v367 = vld [vmem:[%s336 + $0xc8] sm:$0xff]
        %v368 = vld [vmem:[%s336 + $0xd0] sm:$0xff]
        %v369 = vld [vmem:[%s1] sm:$0xf]
        %v370 = vld [vmem:[%s1 + $0x4] sm:$0xf]
        %v371 = vld [vmem:[%s1 + $0x8] sm:$0xf]
        %v372 = vld [vmem:[%s1 + $0xc] sm:$0xf]
        %v373 = vld [vmem:[%s1 + $0x10] sm:$0xf]
        %v374 = vld [vmem:[%s1 + $0x14] sm:$0xf]
        %v375 = vld [vmem:[%s1 + $0x18] sm:$0xf]
        %v376 = vld [vmem:[%s1 + $0x1c] sm:$0xf]
        %v377 = vld [vmem:[%s1 + $0x20] sm:$0xf]
        %v378 = vld [vmem:[%s1 + $0x24] sm:$0xf]
        %v379 = vld [vmem:[%s1 + $0x28] sm:$0xf]
        %v380 = vld [vmem:[%s1 + $0x2c] sm:$0xf]
        %v381 = vld [vmem:[%s1 + $0x30] sm:$0xf]
        %v382 = vld [vmem:[%s1 + $0x34] sm:$0xf]
        %v383 = vld [vmem:[%s1 + $0x38] sm:$0xf]
        %v384 = vld [vmem:[%s1 + $0x3c] sm:$0xf]
        %v385 = vld [vmem:[%s1 + $0x40] sm:$0xf]
        %v386 = vld [vmem:[%s1 + $0x44] sm:$0xf]
        %v387 = vld [vmem:[%s1 + $0x48] sm:$0xf]
        %v388 = vld [vmem:[%s1 + $0x4c] sm:$0xf]
        %v389 = vld [vmem:[%s1 + $0x50] sm:$0xf]
        %v390 = vld [vmem:[%s1 + $0x54] sm:$0xf]
        %v391 = vld [vmem:[%s1 + $0x58] sm:$0xf]
        %v392 = vld [vmem:[%s1 + $0x5c] sm:$0xf]
        %v393 = vld [vmem:[%s1 + $0x60] sm:$0xf]
        %v394 = vld [vmem:[%s1 + $0x64] sm:$0xf]
        %v395 = vld [vmem:[%s1 + $0x68] sm:$0xf]
        %v396 = vld [vmem:[%s1 + $0x6c] sm:$0xf]
        %v397 = vld [vmem:[%s1 + $0x70] sm:$0xf]
        %v398 = vld [vmem:[%s1 + $0x74] sm:$0xf]
        %v399 = vld [vmem:[%s1 + $0x78] sm:$0xf]
        %v400 = vld [vmem:[%s1 + $0x7c] sm:$0xf]
        %v428 = vunpack.c.l.b16 %v342
        %v429 = vunpack.c.h.b16 %v342
        %v430 = vunpack.c.l.b16 %v343
        %v431 = vunpack.c.h.b16 %v343
        %v432 = vunpack.c.l.b16 %v344
        %v433 = vunpack.c.h.b16 %v344
        %v434 = vunpack.c.l.b16 %v345
        %v435 = vunpack.c.h.b16 %v345
        %v436 = vunpack.c.l.b16 %v346
        %v437 = vunpack.c.h.b16 %v346
        %v438 = vunpack.c.l.b16 %v347
        %v439 = vunpack.c.h.b16 %v347
        %v440 = vunpack.c.l.b16 %v348
        %v441 = vunpack.c.h.b16 %v348
        %v442 = vunpack.c.l.b16 %v349
        %v443 = vunpack.c.h.b16 %v349
        %v444 = vunpack.c.l.b16 %v350
        %v445 = vunpack.c.h.b16 %v350
        %v446 = vunpack.c.l.b16 %v351
        %v447 = vunpack.c.h.b16 %v351
        %v448 = vunpack.c.l.b16 %v352
        %v449 = vunpack.c.h.b16 %v352
        %v450 = vunpack.c.l.b16 %v353
        %v451 = vunpack.c.h.b16 %v353
        %v452 = vunpack.c.l.b16 %v354
        %v453 = vunpack.c.h.b16 %v354
        %v454 = vunpack.c.l.b16 %v355
        %v455 = vunpack.c.h.b16 %v355
        %v456 = vunpack.c.l.b16 %v356
        %v457 = vunpack.c.h.b16 %v356
        %v458 = vunpack.c.l.b16 %v357
        %v459 = vunpack.c.h.b16 %v357
        %v460 = vunpack.c.l.b16 %v358
        %v461 = vunpack.c.h.b16 %v358
        %v462 = vunpack.c.l.b16 %v359
        %v463 = vunpack.c.h.b16 %v359
        %v464 = vunpack.c.l.b16 %v360
        %v465 = vunpack.c.h.b16 %v360
        %v466 = vunpack.c.l.b16 %v361
        %v467 = vunpack.c.h.b16 %v361
        %v468 = vunpack.c.l.b16 %v362
        %v469 = vunpack.c.h.b16 %v362
        %v470 = vunpack.c.l.b16 %v363
        %v471 = vunpack.c.h.b16 %v363
        %v472 = vunpack.c.l.b16 %v364
        %v473 = vunpack.c.h.b16 %v364
        %v474 = vunpack.c.l.b16 %v365
        %v475 = vunpack.c.h.b16 %v365
        %v476 = vunpack.c.l.b16 %v366
        %v477 = vunpack.c.h.b16 %v366
        %v478 = vunpack.c.l.b16 %v367
        %v479 = vunpack.c.h.b16 %v367
        %v480 = vunpack.c.l.b16 %v368
        %v481 = vunpack.c.h.b16 %v368
        %v482 = vpack.c.b16 %v430, %v428
        %v483 = vpack.c.b16 %v431, %v429
        %v484 = vpack.c.b16 %v434, %v432
        %v485 = vpack.c.b16 %v435, %v433
        %v486 = vpack.c.b16 %v438, %v436
        %v487 = vpack.c.b16 %v439, %v437
        %v488 = vpack.c.b16 %v442, %v440
        %v489 = vpack.c.b16 %v443, %v441
        %v490 = vpack.c.b16 %v446, %v444
        %v491 = vpack.c.b16 %v447, %v445
        %v492 = vpack.c.b16 %v450, %v448
        %v493 = vpack.c.b16 %v451, %v449
        %v494 = vpack.c.b16 %v454, %v452
        %v495 = vpack.c.b16 %v455, %v453
        %v496 = vpack.c.b16 %v458, %v456
        %v497 = vpack.c.b16 %v459, %v457
        %v498 = vpack.c.b16 %v462, %v460
        %v499 = vpack.c.b16 %v463, %v461
        %v500 = vpack.c.b16 %v466, %v464
        %v501 = vpack.c.b16 %v467, %v465
        %v502 = vpack.c.b16 %v470, %v468
        %v503 = vpack.c.b16 %v471, %v469
        %v504 = vpack.c.b16 %v474, %v472
        %v505 = vpack.c.b16 %v475, %v473
        %v506 = vpack.c.b16 %v478, %v476
        %v507 = vpack.c.b16 %v479, %v477
        %v508 = vpack.c.b16 %v480, %v480
        %v509 = vpack.c.b16 %v481, %v481
        %v570 = vunpack.c.l.b16 %v369
        %v571 = vunpack.c.l.b16 %v370
        %v572 = vunpack.c.l.b16 %v371
        %v573 = vunpack.c.l.b16 %v372
        %v574 = vunpack.c.l.b16 %v373
        %v575 = vunpack.c.l.b16 %v374
        %v576 = vunpack.c.l.b16 %v375
        %v577 = vunpack.c.l.b16 %v376
        %v578 = vunpack.c.l.b16 %v377
        %v579 = vunpack.c.l.b16 %v378
        %v580 = vunpack.c.l.b16 %v379
        %v581 = vunpack.c.l.b16 %v380
        %v582 = vunpack.c.l.b16 %v381
        %v583 = vunpack.c.l.b16 %v382
        %v584 = vunpack.c.l.b16 %v383
        %v585 = vunpack.c.l.b16 %v384
        %v586 = vunpack.c.l.b16 %v385
        %v587 = vunpack.c.l.b16 %v386
        %v588 = vunpack.c.l.b16 %v387
        %v589 = vunpack.c.l.b16 %v388
        %v590 = vunpack.c.l.b16 %v389
        %v591 = vunpack.c.l.b16 %v390
        %v592 = vunpack.c.l.b16 %v391
        %v593 = vunpack.c.l.b16 %v392
        %v594 = vunpack.c.l.b16 %v393
        %v595 = vunpack.c.l.b16 %v394
        %v596 = vunpack.c.l.b16 %v395
        %v597 = vunpack.c.l.b16 %v396
        %v598 = vunpack.c.l.b16 %v397
        %v599 = vunpack.c.l.b16 %v398
        %v600 = vunpack.c.l.b16 %v399
        %v601 = vunpack.c.l.b16 %v400
        %v602 = vpack.c.b16 %v571, %v570
        %v603 = vpack.c.b16 %v573, %v572
        %v604 = vpack.c.b16 %v575, %v574
        %v605 = vpack.c.b16 %v577, %v576
        %v606 = vpack.c.b16 %v579, %v578
        %v607 = vpack.c.b16 %v581, %v580
        %v608 = vpack.c.b16 %v583, %v582
        %v609 = vpack.c.b16 %v585, %v584
        %v610 = vpack.c.b16 %v587, %v586
        %v611 = vpack.c.b16 %v589, %v588
        %v612 = vpack.c.b16 %v591, %v590
        %v613 = vpack.c.b16 %v593, %v592
        %v614 = vpack.c.b16 %v595, %v594
        %v615 = vpack.c.b16 %v597, %v596
        %v616 = vpack.c.b16 %v599, %v598
        %v617 = vpack.c.b16 %v601, %v600
        %634 = vmatprep.subr.bf16.mxu0 0
        %635 = vmatpush1.bf16.msra.mxu0 %v609
        %636 = vmatprep.subr.bf16.mxu0 0
        %637 = vmatpush1.bf16.msra.mxu0 %v608
        %638 = vmatprep.subr.bf16.mxu0 0
        %639 = vmatpush1.bf16.msra.mxu0 %v607
        %640 = vmatprep.subr.bf16.mxu0 0
        %641 = vmatpush1.bf16.msra.mxu0 %v606
        %642 = vmatprep.subr.bf16.mxu0 0
        %643 = vmatpush1.bf16.msra.mxu0 %v605
        %644 = vmatprep.subr.bf16.mxu0 0
        %645 = vmatpush1.bf16.msra.mxu0 %v604
        %646 = vmatprep.subr.bf16.mxu0 0
        %647 = vmatpush1.bf16.msra.mxu0 %v603
        %648 = vmatprep.subr.bf16.mxu0 0
        %649 = vmatpush1.bf16.msra.mxu0 %v602
        %650 = vmatprep.subr.bf16.mxu0 0
        %651 = vmatpush2.bf16.msra.mxu0 %v617
        %652 = vmatprep.subr.bf16.mxu0 0
        %653 = vmatpush2.bf16.msra.mxu0 %v616
        %654 = vmatprep.subr.bf16.mxu0 0
        %655 = vmatpush2.bf16.msra.mxu0 %v615
        %656 = vmatprep.subr.bf16.mxu0 0
        %657 = vmatpush2.bf16.msra.mxu0 %v614
        %658 = vmatprep.subr.bf16.mxu0 0
        %659 = vmatpush2.bf16.msra.mxu0 %v613
        %660 = vmatprep.subr.bf16.mxu0 0
        %661 = vmatpush2.bf16.msra.mxu0 %v612
        %662 = vmatprep.subr.bf16.mxu0 0
        %663 = vmatpush2.bf16.msra.mxu0 %v611
        %664 = vmatprep.subr.bf16.mxu0 0
        %665 = vmatpush2.bf16.msra.mxu0 %v610
        %666 = vmatprep.mubr.bf16.mxu0 %v483
        %667 = vmatmul.mubr.bf16.gmra.mxu0 %v482
        %v668 = vpop.f32.mrf.mxu0
        %v669 = vadd.f32 0.0, %v668
        %v670 = vpop.f32.mrf.mxu0
        %v671 = vpop.f32.mrf.mxu0
        %v672 = vadd.f32 0.0, %v671
        %v673 = vpop.f32.mrf.mxu0
        %674 = vmatprep.mubr.bf16.mxu0 %v485
        %675 = vmatmul.mubr.bf16.gmra.mxu0 %v484
        %v676 = vpop.f32.mrf.mxu0
        %v677 = vadd.f32 0.0, %v676
        %v678 = vpop.f32.mrf.mxu0
        %v679 = vpop.f32.mrf.mxu0
        %v680 = vadd.f32 0.0, %v679
        %v681 = vpop.f32.mrf.mxu0
        %682 = vmatprep.mubr.bf16.mxu0 %v487
        %683 = vmatmul.mubr.bf16.gmra.mxu0 %v486
        %v684 = vpop.f32.mrf.mxu0
        %v685 = vadd.f32 0.0, %v684
        %v686 = vpop.f32.mrf.mxu0
        %v687 = vpop.f32.mrf.mxu0
        %v688 = vadd.f32 0.0, %v687
        %v689 = vpop.f32.mrf.mxu0
        %690 = vmatprep.mubr.bf16.mxu0 %v489
        %691 = vmatmul.mubr.bf16.gmra.mxu0 %v488
        %v692 = vpop.f32.mrf.mxu0
        %v693 = vadd.f32 0.0, %v692
        %v694 = vpop.f32.mrf.mxu0
        %v695 = vpop.f32.mrf.mxu0
        %v696 = vadd.f32 0.0, %v695
        %v697 = vpop.f32.mrf.mxu0
        %698 = vmatprep.mubr.bf16.mxu0 %v491
        %699 = vmatmul.mubr.bf16.gmra.mxu0 %v490
        %v700 = vpop.f32.mrf.mxu0
        %v701 = vadd.f32 0.0, %v700
        %v702 = vpop.f32.mrf.mxu0
        %v703 = vpop.f32.mrf.mxu0
        %v704 = vadd.f32 0.0, %v703
        %v705 = vpop.f32.mrf.mxu0
        %706 = vmatprep.mubr.bf16.mxu0 %v493
        %707 = vmatmul.mubr.bf16.gmra.mxu0 %v492
        %v708 = vpop.f32.mrf.mxu0
        %v709 = vadd.f32 0.0, %v708
        %v710 = vpop.f32.mrf.mxu0
        %v711 = vpop.f32.mrf.mxu0
        %v712 = vadd.f32 0.0, %v711
        %v713 = vpop.f32.mrf.mxu0
        %714 = vmatprep.mubr.bf16.mxu0 %v495
        %715 = vmatmul.mubr.bf16.gmra.mxu0 %v494
        %v716 = vpop.f32.mrf.mxu0
        %v717 = vadd.f32 0.0, %v716
        %v718 = vpop.f32.mrf.mxu0
        %v719 = vpop.f32.mrf.mxu0
        %v720 = vadd.f32 0.0, %v719
        %v721 = vpop.f32.mrf.mxu0
        %722 = vmatprep.mubr.bf16.mxu0 %v497
        %723 = vmatmul.mubr.bf16.gmra.mxu0 %v496
        %v724 = vpop.f32.mrf.mxu0
        %v725 = vadd.f32 0.0, %v724
        %v726 = vpop.f32.mrf.mxu0
        %v727 = vpop.f32.mrf.mxu0
        %v728 = vadd.f32 0.0, %v727
        %v729 = vpop.f32.mrf.mxu0
        %730 = vmatprep.mubr.bf16.mxu0 %v499
        %731 = vmatmul.mubr.bf16.gmra.mxu0 %v498
        %v732 = vpop.f32.mrf.mxu0
        %v733 = vadd.f32 0.0, %v732
        %v734 = vpop.f32.mrf.mxu0
        %v735 = vpop.f32.mrf.mxu0
        %v736 = vadd.f32 0.0, %v735
        %v737 = vpop.f32.mrf.mxu0
        %738 = vmatprep.mubr.bf16.mxu0 %v501
        %739 = vmatmul.mubr.bf16.gmra.mxu0 %v500
        %v740 = vpop.f32.mrf.mxu0
        %v741 = vadd.f32 0.0, %v740
        %v742 = vpop.f32.mrf.mxu0
        %v743 = vpop.f32.mrf.mxu0
        %v744 = vadd.f32 0.0, %v743
        %v745 = vpop.f32.mrf.mxu0
        %746 = vmatprep.mubr.bf16.mxu0 %v503
        %747 = vmatmul.mubr.bf16.gmra.mxu0 %v502
        %v748 = vpop.f32.mrf.mxu0
        %v749 = vadd.f32 0.0, %v748
        %v750 = vpop.f32.mrf.mxu0
        %v751 = vpop.f32.mrf.mxu0
        %v752 = vadd.f32 0.0, %v751
        %v753 = vpop.f32.mrf.mxu0
        %754 = vmatprep.mubr.bf16.mxu0 %v505
        %755 = vmatmul.mubr.bf16.gmra.mxu0 %v504
        %v756 = vpop.f32.mrf.mxu0
        %v757 = vadd.f32 0.0, %v756
        %v758 = vpop.f32.mrf.mxu0
        %v759 = vpop.f32.mrf.mxu0
        %v760 = vadd.f32 0.0, %v759
        %v761 = vpop.f32.mrf.mxu0
        %762 = vmatprep.mubr.bf16.mxu0 %v507
        %763 = vmatmul.mubr.bf16.gmra.mxu0 %v506
        %v764 = vpop.f32.mrf.mxu0
        %v765 = vadd.f32 0.0, %v764
        %v766 = vpop.f32.mrf.mxu0
        %v767 = vpop.f32.mrf.mxu0
        %v768 = vadd.f32 0.0, %v767
        %v769 = vpop.f32.mrf.mxu0
        %770 = vmatprep.mubr.bf16.mxu0 %v509
        %771 = vmatmul.mubr.bf16.gmra.mxu0 %v508
        %v772 = vpop.f32.mrf.mxu0
        %v773 = vadd.f32 0.0, %v772
        %v774 = vpop.f32.mrf.mxu0
        %v775 = vpop.f32.mrf.mxu0
        %v776 = vpop.f32.mrf.mxu0
        %777 = vdwg.mxu0
        %v778 = vld [vmem:[%s2] sm:$0x1]
        %v780 = vlaneseq
        %v781 = vshrl.u32 %v780, 7
        %v782 = vsub.s32 0, %v781
        %v783 = vrot.slane %v778, %v782
        %v785 = vmul.f32 %v669, %v783
        %v786 = vmul.f32 %v672, %v783
        %v787 = vmul.f32 %v677, %v783
        %v788 = vmul.f32 %v680, %v783
        %v789 = vmul.f32 %v685, %v783
        %v790 = vmul.f32 %v688, %v783
        %v791 = vmul.f32 %v693, %v783
        %v792 = vmul.f32 %v696, %v783
        %v793 = vmul.f32 %v701, %v783
        %v794 = vmul.f32 %v704, %v783
        %v795 = vmul.f32 %v709, %v783
        %v796 = vmul.f32 %v712, %v783
        %v797 = vmul.f32 %v717, %v783
        %v798 = vmul.f32 %v720, %v783
        %v799 = vmul.f32 %v725, %v783
        %v800 = vmul.f32 %v728, %v783
        %v801 = vmul.f32 %v733, %v783
        %v802 = vmul.f32 %v736, %v783
        %v803 = vmul.f32 %v741, %v783
        %v804 = vmul.f32 %v744, %v783
        %v805 = vmul.f32 %v749, %v783
        %v806 = vmul.f32 %v752, %v783
        %v807 = vmul.f32 %v757, %v783
        %v808 = vmul.f32 %v760, %v783
        %v809 = vmul.f32 %v765, %v783
        %v810 = vmul.f32 %v768, %v783
        %v811 = vmul.f32 %v773, %v783
        %v812 = vld [vmem:[%s3] sm:$0x1]
        %v814 = vlaneseq
        %v815 = vshrl.u32 %v814, 7
        %v816 = vsub.s32 0, %v815
        %v817 = vrot.slane %v812, %v816
        %v819 = vadd.f32 %v785, %v817
        %v820 = vadd.f32 %v786, %v817
        %v821 = vadd.f32 %v787, %v817
        %v822 = vadd.f32 %v788, %v817
        %v823 = vadd.f32 %v789, %v817
        %v824 = vadd.f32 %v790, %v817
        %v825 = vadd.f32 %v791, %v817
        %v826 = vadd.f32 %v792, %v817
        %v827 = vadd.f32 %v793, %v817
        %v828 = vadd.f32 %v794, %v817
        %v829 = vadd.f32 %v795, %v817
        %v830 = vadd.f32 %v796, %v817
        %v831 = vadd.f32 %v797, %v817
        %v832 = vadd.f32 %v798, %v817
        %v833 = vadd.f32 %v799, %v817
        %v834 = vadd.f32 %v800, %v817
        %v835 = vadd.f32 %v801, %v817
        %v836 = vadd.f32 %v802, %v817
        %v837 = vadd.f32 %v803, %v817
        %v838 = vadd.f32 %v804, %v817
        %v839 = vadd.f32 %v805, %v817
        %v840 = vadd.f32 %v806, %v817
        %v841 = vadd.f32 %v807, %v817
        %v842 = vadd.f32 %v808, %v817
        %v843 = vadd.f32 %v809, %v817
        %v844 = vadd.f32 %v810, %v817
        %v845 = vadd.f32 %v811, %v817
        %v846 = vmax.f32 %v819, 0.0
        %v847 = vmax.f32 %v820, 0.0
        %v848 = vmax.f32 %v821, 0.0
        %v849 = vmax.f32 %v822, 0.0
        %v850 = vmax.f32 %v823, 0.0
        %v851 = vmax.f32 %v824, 0.0
        %v852 = vmax.f32 %v825, 0.0
        %v853 = vmax.f32 %v826, 0.0
        %v854 = vmax.f32 %v827, 0.0
        %v855 = vmax.f32 %v828, 0.0
        %v856 = vmax.f32 %v829, 0.0
        %v857 = vmax.f32 %v830, 0.0
        %v858 = vmax.f32 %v831, 0.0
        %v859 = vmax.f32 %v832, 0.0
        %v860 = vmax.f32 %v833, 0.0
        %v861 = vmax.f32 %v834, 0.0
        %v862 = vmax.f32 %v835, 0.0
        %v863 = vmax.f32 %v836, 0.0
        %v864 = vmax.f32 %v837, 0.0
        %v865 = vmax.f32 %v838, 0.0
        %v866 = vmax.f32 %v839, 0.0
        %v867 = vmax.f32 %v840, 0.0
        %v868 = vmax.f32 %v841, 0.0
        %v869 = vmax.f32 %v842, 0.0
        %v870 = vmax.f32 %v843, 0.0
        %v871 = vmax.f32 %v844, 0.0
        %v872 = vmax.f32 %v845, 0.0
        %v900 = vcombine.high %v846, %v846
        %v902 = vunpack.c.l.s4 1983009808
        %v903 = vunpack.c.0.s8 %v902
        %v904 = vlaneseq
        %v905 = vshrl.u32 %v904, 7
        %v906 = vsub.s32 %v903, %v905
        %v907 = vrot.slane %v846, %v906
        %v909 = vunpack.c.l.s4 1983009808
        %v910 = vunpack.c.0.s8 %v909
        %v911 = vlaneseq
        %v912 = vshrl.u32 %v911, 7
        %v913 = vsub.s32 %v910, %v912
        %v914 = vrot.slane %v900, %v913
        %v915 = vcombine.high %v907, %v907
        %v916 = vcombine.high %v914, %v914
        %v917 = vcombine.high %v847, %v847
        %v919 = vunpack.c.l.s4 1983009808
        %v920 = vunpack.c.0.s8 %v919
        %v921 = vlaneseq
        %v922 = vshrl.u32 %v921, 7
        %v923 = vsub.s32 %v920, %v922
        %v924 = vrot.slane %v847, %v923
        %v926 = vunpack.c.l.s4 1983009808
        %v927 = vunpack.c.0.s8 %v926
        %v928 = vlaneseq
        %v929 = vshrl.u32 %v928, 7
        %v930 = vsub.s32 %v927, %v929
        %v931 = vrot.slane %v917, %v930
        %v932 = vcombine.high %v924, %v924
        %v933 = vcombine.high %v931, %v931
        %v934 = vcombine.high %v848, %v848
        %v936 = vunpack.c.l.s4 1983009808
        %v937 = vunpack.c.0.s8 %v936
        %v938 = vlaneseq
        %v939 = vshrl.u32 %v938, 7
        %v940 = vsub.s32 %v937, %v939
        %v941 = vrot.slane %v848, %v940
        %v943 = vunpack.c.l.s4 1983009808
        %v944 = vunpack.c.0.s8 %v943
        %v945 = vlaneseq
        %v946 = vshrl.u32 %v945, 7
        %v947 = vsub.s32 %v944, %v946
        %v948 = vrot.slane %v934, %v947
        %v949 = vcombine.high %v941, %v941
        %v950 = vcombine.high %v948, %v948
        %v951 = vcombine.high %v849, %v849
        %v953 = vunpack.c.l.s4 1983009808
        %v954 = vunpack.c.0.s8 %v953
        %v955 = vlaneseq
        %v956 = vshrl.u32 %v955, 7
        %v957 = vsub.s32 %v954, %v956
        %v958 = vrot.slane %v849, %v957
        %v960 = vunpack.c.l.s4 1983009808
        %v961 = vunpack.c.0.s8 %v960
        %v962 = vlaneseq
        %v963 = vshrl.u32 %v962, 7
        %v964 = vsub.s32 %v961, %v963
        %v965 = vrot.slane %v951, %v964
        %v966 = vcombine.high %v958, %v958
        %v967 = vcombine.high %v965, %v965
        %v968 = vcombine.high %v850, %v850
        %v970 = vunpack.c.l.s4 1983009808
        %v971 = vunpack.c.0.s8 %v970
        %v972 = vlaneseq
        %v973 = vshrl.u32 %v972, 7
        %v974 = vsub.s32 %v971, %v973
        %v975 = vrot.slane %v850, %v974
        %v977 = vunpack.c.l.s4 1983009808
        %v978 = vunpack.c.0.s8 %v977
        %v979 = vlaneseq
        %v980 = vshrl.u32 %v979, 7
        %v981 = vsub.s32 %v978, %v980
        %v982 = vrot.slane %v968, %v981
        %v983 = vcombine.high %v975, %v975
        %v984 = vcombine.high %v982, %v982
        %v985 = vcombine.high %v851, %v851
        %v987 = vunpack.c.l.s4 1983009808
        %v988 = vunpack.c.0.s8 %v987
        %v989 = vlaneseq
        %v990 = vshrl.u32 %v989, 7
        %v991 = vsub.s32 %v988, %v990
        %v992 = vrot.slane %v851, %v991
        %v994 = vunpack.c.l.s4 1983009808
        %v995 = vunpack.c.0.s8 %v994
        %v996 = vlaneseq
        %v997 = vshrl.u32 %v996, 7
        %v998 = vsub.s32 %v995, %v997
        %v999 = vrot.slane %v985, %v998
        %v1000 = vcombine.high %v992, %v992
        %v1001 = vcombine.high %v999, %v999
        %v1002 = vcombine.high %v852, %v852
        %v1004 = vunpack.c.l.s4 1983009808
        %v1005 = vunpack.c.0.s8 %v1004
        %v1006 = vlaneseq
        %v1007 = vshrl.u32 %v1006, 7
        %v1008 = vsub.s32 %v1005, %v1007
        %v1009 = vrot.slane %v852, %v1008
        %v1011 = vunpack.c.l.s4 1983009808
        %v1012 = vunpack.c.0.s8 %v1011
        %v1013 = vlaneseq
        %v1014 = vshrl.u32 %v1013, 7
        %v1015 = vsub.s32 %v1012, %v1014
        %v1016 = vrot.slane %v1002, %v1015
        %v1017 = vcombine.high %v1009, %v1009
        %v1018 = vcombine.high %v1016, %v1016
        %v1019 = vcombine.high %v853, %v853
        %v1021 = vunpack.c.l.s4 1983009808
        %v1022 = vunpack.c.0.s8 %v1021
        %v1023 = vlaneseq
        %v1024 = vshrl.u32 %v1023, 7
        %v1025 = vsub.s32 %v1022, %v1024
        %v1026 = vrot.slane %v853, %v1025
        %v1028 = vunpack.c.l.s4 1983009808
        %v1029 = vunpack.c.0.s8 %v1028
        %v1030 = vlaneseq
        %v1031 = vshrl.u32 %v1030, 7
        %v1032 = vsub.s32 %v1029, %v1031
        %v1033 = vrot.slane %v1019, %v1032
        %v1034 = vcombine.high %v1026, %v1026
        %v1035 = vcombine.high %v1033, %v1033
        %v1036 = vcombine.high %v854, %v854
        %v1038 = vunpack.c.l.s4 1983009808
        %v1039 = vunpack.c.0.s8 %v1038
        %v1040 = vlaneseq
        %v1041 = vshrl.u32 %v1040, 7
        %v1042 = vsub.s32 %v1039, %v1041
        %v1043 = vrot.slane %v854, %v1042
        %v1045 = vunpack.c.l.s4 1983009808
        %v1046 = vunpack.c.0.s8 %v1045
        %v1047 = vlaneseq
        %v1048 = vshrl.u32 %v1047, 7
        %v1049 = vsub.s32 %v1046, %v1048
        %v1050 = vrot.slane %v1036, %v1049
        %v1051 = vcombine.high %v1043, %v1043
        %v1052 = vcombine.high %v1050, %v1050
        %v1053 = vcombine.high %v855, %v855
        %v1055 = vunpack.c.l.s4 1983009808
        %v1056 = vunpack.c.0.s8 %v1055
        %v1057 = vlaneseq
        %v1058 = vshrl.u32 %v1057, 7
        %v1059 = vsub.s32 %v1056, %v1058
        %v1060 = vrot.slane %v855, %v1059
        %v1062 = vunpack.c.l.s4 1983009808
        %v1063 = vunpack.c.0.s8 %v1062
        %v1064 = vlaneseq
        %v1065 = vshrl.u32 %v1064, 7
        %v1066 = vsub.s32 %v1063, %v1065
        %v1067 = vrot.slane %v1053, %v1066
        %v1068 = vcombine.high %v1060, %v1060
        %v1069 = vcombine.high %v1067, %v1067
        %v1070 = vcombine.high %v856, %v856
        %v1072 = vunpack.c.l.s4 1983009808
        %v1073 = vunpack.c.0.s8 %v1072
        %v1074 = vlaneseq
        %v1075 = vshrl.u32 %v1074, 7
        %v1076 = vsub.s32 %v1073, %v1075
        %v1077 = vrot.slane %v856, %v1076
        %v1079 = vunpack.c.l.s4 1983009808
        %v1080 = vunpack.c.0.s8 %v1079
        %v1081 = vlaneseq
        %v1082 = vshrl.u32 %v1081, 7
        %v1083 = vsub.s32 %v1080, %v1082
        %v1084 = vrot.slane %v1070, %v1083
        %v1085 = vcombine.high %v1077, %v1077
        %v1086 = vcombine.high %v1084, %v1084
        %v1087 = vcombine.high %v857, %v857
        %v1089 = vunpack.c.l.s4 1983009808
        %v1090 = vunpack.c.0.s8 %v1089
        %v1091 = vlaneseq
        %v1092 = vshrl.u32 %v1091, 7
        %v1093 = vsub.s32 %v1090, %v1092
        %v1094 = vrot.slane %v857, %v1093
        %v1096 = vunpack.c.l.s4 1983009808
        %v1097 = vunpack.c.0.s8 %v1096
        %v1098 = vlaneseq
        %v1099 = vshrl.u32 %v1098, 7
        %v1100 = vsub.s32 %v1097, %v1099
        %v1101 = vrot.slane %v1087, %v1100
        %v1102 = vcombine.high %v1094, %v1094
        %v1103 = vcombine.high %v1101, %v1101
        %v1104 = vcombine.high %v858, %v858
        %v1106 = vunpack.c.l.s4 1983009808
        %v1107 = vunpack.c.0.s8 %v1106
        %v1108 = vlaneseq
        %v1109 = vshrl.u32 %v1108, 7
        %v1110 = vsub.s32 %v1107, %v1109
        %v1111 = vrot.slane %v858, %v1110
        %v1113 = vunpack.c.l.s4 1983009808
        %v1114 = vunpack.c.0.s8 %v1113
        %v1115 = vlaneseq
        %v1116 = vshrl.u32 %v1115, 7
        %v1117 = vsub.s32 %v1114, %v1116
        %v1118 = vrot.slane %v1104, %v1117
        %v1119 = vcombine.high %v1111, %v1111
        %v1120 = vcombine.high %v1118, %v1118
        %v1121 = vcombine.high %v859, %v859
        %v1123 = vunpack.c.l.s4 1983009808
        %v1124 = vunpack.c.0.s8 %v1123
        %v1125 = vlaneseq
        %v1126 = vshrl.u32 %v1125, 7
        %v1127 = vsub.s32 %v1124, %v1126
        %v1128 = vrot.slane %v859, %v1127
        %v1130 = vunpack.c.l.s4 1983009808
        %v1131 = vunpack.c.0.s8 %v1130
        %v1132 = vlaneseq
        %v1133 = vshrl.u32 %v1132, 7
        %v1134 = vsub.s32 %v1131, %v1133
        %v1135 = vrot.slane %v1121, %v1134
        %v1136 = vcombine.high %v1128, %v1128
        %v1137 = vcombine.high %v1135, %v1135
        %v1138 = vcombine.high %v860, %v860
        %v1140 = vunpack.c.l.s4 1983009808
        %v1141 = vunpack.c.0.s8 %v1140
        %v1142 = vlaneseq
        %v1143 = vshrl.u32 %v1142, 7
        %v1144 = vsub.s32 %v1141, %v1143
        %v1145 = vrot.slane %v860, %v1144
        %v1147 = vunpack.c.l.s4 1983009808
        %v1148 = vunpack.c.0.s8 %v1147
        %v1149 = vlaneseq
        %v1150 = vshrl.u32 %v1149, 7
        %v1151 = vsub.s32 %v1148, %v1150
        %v1152 = vrot.slane %v1138, %v1151
        %v1153 = vcombine.high %v1145, %v1145
        %v1154 = vcombine.high %v1152, %v1152
        %v1155 = vcombine.high %v861, %v861
        %v1157 = vunpack.c.l.s4 1983009808
        %v1158 = vunpack.c.0.s8 %v1157
        %v1159 = vlaneseq
        %v1160 = vshrl.u32 %v1159, 7
        %v1161 = vsub.s32 %v1158, %v1160
        %v1162 = vrot.slane %v861, %v1161
        %v1164 = vunpack.c.l.s4 1983009808
        %v1165 = vunpack.c.0.s8 %v1164
        %v1166 = vlaneseq
        %v1167 = vshrl.u32 %v1166, 7
        %v1168 = vsub.s32 %v1165, %v1167
        %v1169 = vrot.slane %v1155, %v1168
        %v1170 = vcombine.high %v1162, %v1162
        %v1171 = vcombine.high %v1169, %v1169
        %v1172 = vcombine.high %v862, %v862
        %v1174 = vunpack.c.l.s4 1983009808
        %v1175 = vunpack.c.0.s8 %v1174
        %v1176 = vlaneseq
        %v1177 = vshrl.u32 %v1176, 7
        %v1178 = vsub.s32 %v1175, %v1177
        %v1179 = vrot.slane %v862, %v1178
        %v1181 = vunpack.c.l.s4 1983009808
        %v1182 = vunpack.c.0.s8 %v1181
        %v1183 = vlaneseq
        %v1184 = vshrl.u32 %v1183, 7
        %v1185 = vsub.s32 %v1182, %v1184
        %v1186 = vrot.slane %v1172, %v1185
        %v1187 = vcombine.high %v1179, %v1179
        %v1188 = vcombine.high %v1186, %v1186
        %v1189 = vcombine.high %v863, %v863
        %v1191 = vunpack.c.l.s4 1983009808
        %v1192 = vunpack.c.0.s8 %v1191
        %v1193 = vlaneseq
        %v1194 = vshrl.u32 %v1193, 7
        %v1195 = vsub.s32 %v1192, %v1194
        %v1196 = vrot.slane %v863, %v1195
        %v1198 = vunpack.c.l.s4 1983009808
        %v1199 = vunpack.c.0.s8 %v1198
        %v1200 = vlaneseq
        %v1201 = vshrl.u32 %v1200, 7
        %v1202 = vsub.s32 %v1199, %v1201
        %v1203 = vrot.slane %v1189, %v1202
        %v1204 = vcombine.high %v1196, %v1196
        %v1205 = vcombine.high %v1203, %v1203
        %v1206 = vcombine.high %v864, %v864
        %v1208 = vunpack.c.l.s4 1983009808
        %v1209 = vunpack.c.0.s8 %v1208
        %v1210 = vlaneseq
        %v1211 = vshrl.u32 %v1210, 7
        %v1212 = vsub.s32 %v1209, %v1211
        %v1213 = vrot.slane %v864, %v1212
        %v1215 = vunpack.c.l.s4 1983009808
        %v1216 = vunpack.c.0.s8 %v1215
        %v1217 = vlaneseq
        %v1218 = vshrl.u32 %v1217, 7
        %v1219 = vsub.s32 %v1216, %v1218
        %v1220 = vrot.slane %v1206, %v1219
        %v1221 = vcombine.high %v1213, %v1213
        %v1222 = vcombine.high %v1220, %v1220
        %v1223 = vcombine.high %v865, %v865
        %v1225 = vunpack.c.l.s4 1983009808
        %v1226 = vunpack.c.0.s8 %v1225
        %v1227 = vlaneseq
        %v1228 = vshrl.u32 %v1227, 7
        %v1229 = vsub.s32 %v1226, %v1228
        %v1230 = vrot.slane %v865, %v1229
        %v1232 = vunpack.c.l.s4 1983009808
        %v1233 = vunpack.c.0.s8 %v1232
        %v1234 = vlaneseq
        %v1235 = vshrl.u32 %v1234, 7
        %v1236 = vsub.s32 %v1233, %v1235
        %v1237 = vrot.slane %v1223, %v1236
        %v1238 = vcombine.high %v1230, %v1230
        %v1239 = vcombine.high %v1237, %v1237
        %v1240 = vcombine.high %v866, %v866
        %v1242 = vunpack.c.l.s4 1983009808
        %v1243 = vunpack.c.0.s8 %v1242
        %v1244 = vlaneseq
        %v1245 = vshrl.u32 %v1244, 7
        %v1246 = vsub.s32 %v1243, %v1245
        %v1247 = vrot.slane %v866, %v1246
        %v1249 = vunpack.c.l.s4 1983009808
        %v1250 = vunpack.c.0.s8 %v1249
        %v1251 = vlaneseq
        %v1252 = vshrl.u32 %v1251, 7
        %v1253 = vsub.s32 %v1250, %v1252
        %v1254 = vrot.slane %v1240, %v1253
        %v1255 = vcombine.high %v1247, %v1247
        %v1256 = vcombine.high %v1254, %v1254
        %v1257 = vcombine.high %v867, %v867
        %v1259 = vunpack.c.l.s4 1983009808
        %v1260 = vunpack.c.0.s8 %v1259
        %v1261 = vlaneseq
        %v1262 = vshrl.u32 %v1261, 7
        %v1263 = vsub.s32 %v1260, %v1262
        %v1264 = vrot.slane %v867, %v1263
        %v1266 = vunpack.c.l.s4 1983009808
        %v1267 = vunpack.c.0.s8 %v1266
        %v1268 = vlaneseq
        %v1269 = vshrl.u32 %v1268, 7
        %v1270 = vsub.s32 %v1267, %v1269
        %v1271 = vrot.slane %v1257, %v1270
        %v1272 = vcombine.high %v1264, %v1264
        %v1273 = vcombine.high %v1271, %v1271
        %v1274 = vcombine.high %v868, %v868
        %v1276 = vunpack.c.l.s4 1983009808
        %v1277 = vunpack.c.0.s8 %v1276
        %v1278 = vlaneseq
        %v1279 = vshrl.u32 %v1278, 7
        %v1280 = vsub.s32 %v1277, %v1279
        %v1281 = vrot.slane %v868, %v1280
        %v1283 = vunpack.c.l.s4 1983009808
        %v1284 = vunpack.c.0.s8 %v1283
        %v1285 = vlaneseq
        %v1286 = vshrl.u32 %v1285, 7
        %v1287 = vsub.s32 %v1284, %v1286
        %v1288 = vrot.slane %v1274, %v1287
        %v1289 = vcombine.high %v1281, %v1281
        %v1290 = vcombine.high %v1288, %v1288
        %v1291 = vcombine.high %v869, %v869
        %v1293 = vunpack.c.l.s4 1983009808
        %v1294 = vunpack.c.0.s8 %v1293
        %v1295 = vlaneseq
        %v1296 = vshrl.u32 %v1295, 7
        %v1297 = vsub.s32 %v1294, %v1296
        %v1298 = vrot.slane %v869, %v1297
        %v1300 = vunpack.c.l.s4 1983009808
        %v1301 = vunpack.c.0.s8 %v1300
        %v1302 = vlaneseq
        %v1303 = vshrl.u32 %v1302, 7
        %v1304 = vsub.s32 %v1301, %v1303
        %v1305 = vrot.slane %v1291, %v1304
        %v1306 = vcombine.high %v1298, %v1298
        %v1307 = vcombine.high %v1305, %v1305
        %v1308 = vcombine.high %v870, %v870
        %v1310 = vunpack.c.l.s4 1983009808
        %v1311 = vunpack.c.0.s8 %v1310
        %v1312 = vlaneseq
        %v1313 = vshrl.u32 %v1312, 7
        %v1314 = vsub.s32 %v1311, %v1313
        %v1315 = vrot.slane %v870, %v1314
        %v1317 = vunpack.c.l.s4 1983009808
        %v1318 = vunpack.c.0.s8 %v1317
        %v1319 = vlaneseq
        %v1320 = vshrl.u32 %v1319, 7
        %v1321 = vsub.s32 %v1318, %v1320
        %v1322 = vrot.slane %v1308, %v1321
        %v1323 = vcombine.high %v1315, %v1315
        %v1324 = vcombine.high %v1322, %v1322
        %v1325 = vcombine.high %v871, %v871
        %v1327 = vunpack.c.l.s4 1983009808
        %v1328 = vunpack.c.0.s8 %v1327
        %v1329 = vlaneseq
        %v1330 = vshrl.u32 %v1329, 7
        %v1331 = vsub.s32 %v1328, %v1330
        %v1332 = vrot.slane %v871, %v1331
        %v1334 = vunpack.c.l.s4 1983009808
        %v1335 = vunpack.c.0.s8 %v1334
        %v1336 = vlaneseq
        %v1337 = vshrl.u32 %v1336, 7
        %v1338 = vsub.s32 %v1335, %v1337
        %v1339 = vrot.slane %v1325, %v1338
        %v1340 = vcombine.high %v1332, %v1332
        %v1341 = vcombine.high %v1339, %v1339
        %v1342 = vcombine.high %v872, %v872
        %v1344 = vunpack.c.l.s4 1983009808
        %v1345 = vunpack.c.0.s8 %v1344
        %v1346 = vlaneseq
        %v1347 = vshrl.u32 %v1346, 7
        %v1348 = vsub.s32 %v1345, %v1347
        %v1349 = vrot.slane %v872, %v1348
        %v1351 = vunpack.c.l.s4 1983009808
        %v1352 = vunpack.c.0.s8 %v1351
        %v1353 = vlaneseq
        %v1354 = vshrl.u32 %v1353, 7
        %v1355 = vsub.s32 %v1352, %v1354
        %v1356 = vrot.slane %v1342, %v1355
        %v1357 = vcombine.high %v1349, %v1349
        %v1358 = vcombine.high %v1356, %v1356
        %v1467 = vmax.f32 %v907, %v982
        %v1468 = vmax.f32 %v915, %v984
        %v1469 = vmax.f32 %v914, %v992
        %v1470 = vmax.f32 %v916, %v1000
        %v1471 = vmax.f32 %v924, %v999
        %v1472 = vmax.f32 %v932, %v1001
        %v1473 = vmax.f32 %v931, %v1009
        %v1474 = vmax.f32 %v933, %v1017
        %v1475 = vmax.f32 %v941, %v1016
        %v1476 = vmax.f32 %v949, %v1018
        %v1477 = vmax.f32 %v948, %v1026
        %v1478 = vmax.f32 %v950, %v1034
        %v1479 = vmax.f32 %v958, %v1033
        %v1480 = vmax.f32 %v966, %v1035
        %v1481 = vmax.f32 %v965, %v1043
        %v1482 = vmax.f32 %v967, %v1051
        %v1483 = vmax.f32 %v975, %v1050
        %v1484 = vmax.f32 %v983, %v1052
        %v1485 = vmax.f32 %v982, %v1060
        %v1486 = vmax.f32 %v984, %v1068
        %v1487 = vmax.f32 %v992, %v1067
        %v1488 = vmax.f32 %v1000, %v1069
        %v1489 = vmax.f32 %v999, %v1077
        %v1490 = vmax.f32 %v1001, %v1085
        %v1491 = vmax.f32 %v1009, %v1084
        %v1492 = vmax.f32 %v1017, %v1086
        %v1493 = vmax.f32 %v1016, %v1094
        %v1494 = vmax.f32 %v1018, %v1102
        %v1495 = vmax.f32 %v1026, %v1101
        %v1496 = vmax.f32 %v1034, %v1103
        %v1497 = vmax.f32 %v1033, %v1111
        %v1498 = vmax.f32 %v1035, %v1119
        %v1499 = vmax.f32 %v1043, %v1118
        %v1500 = vmax.f32 %v1051, %v1120
        %v1501 = vmax.f32 %v1050, %v1128
        %v1502 = vmax.f32 %v1052, %v1136
        %v1503 = vmax.f32 %v1485, %v1135
        %v1504 = vmax.f32 %v1486, %v1137
        %v1505 = vmax.f32 %v1487, %v1145
        %v1506 = vmax.f32 %v1488, %v1153
        %v1507 = vmax.f32 %v1489, %v1152
        %v1508 = vmax.f32 %v1490, %v1154
        %v1509 = vmax.f32 %v1491, %v1162
        %v1510 = vmax.f32 %v1492, %v1170
        %v1511 = vmax.f32 %v1493, %v1169
        %v1512 = vmax.f32 %v1494, %v1171
        %v1513 = vmax.f32 %v1495, %v1179
        %v1514 = vmax.f32 %v1496, %v1187
        %v1515 = vmax.f32 %v1497, %v1186
        %v1516 = vmax.f32 %v1498, %v1188
        %v1517 = vmax.f32 %v1499, %v1196
        %v1518 = vmax.f32 %v1500, %v1204
        %v1519 = vmax.f32 %v1501, %v1203
        %v1520 = vmax.f32 %v1502, %v1205
        %v1521 = vmax.f32 %v1135, %v1213
        %v1522 = vmax.f32 %v1137, %v1221
        %v1523 = vmax.f32 %v1145, %v1220
        %v1524 = vmax.f32 %v1153, %v1222
        %v1525 = vmax.f32 %v1152, %v1230
        %v1526 = vmax.f32 %v1154, %v1238
        %v1527 = vmax.f32 %v1162, %v1237
        %v1528 = vmax.f32 %v1170, %v1239
        %v1529 = vmax.f32 %v1169, %v1247
        %v1530 = vmax.f32 %v1171, %v1255
        %v1531 = vmax.f32 %v1179, %v1254
        %v1532 = vmax.f32 %v1187, %v1256
        %v1533 = vmax.f32 %v1186, %v1264
        %v1534 = vmax.f32 %v1188, %v1272
        %v1535 = vmax.f32 %v1196, %v1271
        %v1536 = vmax.f32 %v1204, %v1273
        %v1537 = vmax.f32 %v1203, %v1281
        %v1538 = vmax.f32 %v1205, %v1289
        %v1539 = vmax.f32 %v1521, %v1288
        %v1540 = vmax.f32 %v1522, %v1290
        %v1541 = vmax.f32 %v1523, %v1298
        %v1542 = vmax.f32 %v1524, %v1306
        %v1543 = vmax.f32 %v1525, %v1305
        %v1544 = vmax.f32 %v1526, %v1307
        %v1545 = vmax.f32 %v1527, %v1315
        %v1546 = vmax.f32 %v1528, %v1323
        %v1547 = vmax.f32 %v1529, %v1322
        %v1548 = vmax.f32 %v1530, %v1324
        %v1549 = vmax.f32 %v1531, %v1332
        %v1550 = vmax.f32 %v1532, %v1340
        %v1551 = vmax.f32 %v1533, %v1339
        %v1552 = vmax.f32 %v1534, %v1341
        %v1553 = vmax.f32 %v1535, %v1349
        %v1554 = vmax.f32 %v1536, %v1357
        %v1555 = vmax.f32 %v1537, %v1356
        %v1556 = vmax.f32 %v1538, %v1358
        %v1557 = vmax.f32 %v1467, %v1470
        %v1558 = vmax.f32 %v1468, %v1471
        %v1559 = vmax.f32 %v1469, %v1472
        %v1560 = vmax.f32 %v1503, %v1506
        %v1561 = vmax.f32 %v1504, %v1507
        %v1562 = vmax.f32 %v1505, %v1508
        %v1563 = vmax.f32 %v1539, %v1542
        %v1564 = vmax.f32 %v1540, %v1543
        %v1565 = vmax.f32 %v1541, %v1544
        %v1566 = vmax.f32 %v1470, %v1473
        %v1567 = vmax.f32 %v1471, %v1474
        %v1568 = vmax.f32 %v1472, %v1475
        %v1569 = vmax.f32 %v1506, %v1509
        %v1570 = vmax.f32 %v1507, %v1510
        %v1571 = vmax.f32 %v1508, %v1511
        %v1572 = vmax.f32 %v1542, %v1545
        %v1573 = vmax.f32 %v1543, %v1546
        %v1574 = vmax.f32 %v1544, %v1547
        %v1575 = vmax.f32 %v1566, %v1476
        %v1576 = vmax.f32 %v1567, %v1477
        %v1577 = vmax.f32 %v1568, %v1478
        %v1578 = vmax.f32 %v1569, %v1512
        %v1579 = vmax.f32 %v1570, %v1513
        %v1580 = vmax.f32 %v1571, %v1514
        %v1581 = vmax.f32 %v1572, %v1548
        %v1582 = vmax.f32 %v1573, %v1549
        %v1583 = vmax.f32 %v1574, %v1550
        %v1584 = vmax.f32 %v1476, %v1479
        %v1585 = vmax.f32 %v1477, %v1480
        %v1586 = vmax.f32 %v1478, %v1481
        %v1587 = vmax.f32 %v1512, %v1515
        %v1588 = vmax.f32 %v1513, %v1516
        %v1589 = vmax.f32 %v1514, %v1517
        %v1590 = vmax.f32 %v1548, %v1551
        %v1591 = vmax.f32 %v1549, %v1552
        %v1592 = vmax.f32 %v1550, %v1553
        %v1593 = vmax.f32 %v1584, %v1482
        %v1594 = vmax.f32 %v1585, %v1483
        %v1595 = vmax.f32 %v1586, %v1484
        %v1596 = vmax.f32 %v1587, %v1518
        %v1597 = vmax.f32 %v1588, %v1519
        %v1598 = vmax.f32 %v1589, %v1520
        %v1599 = vmax.f32 %v1590, %v1554
        %v1600 = vmax.f32 %v1591, %v1555
        %v1601 = vmax.f32 %v1592, %v1556
        %v1611 = vrot.slane %v1557, 7
        %v1612 = vrot.slane %v1611, 2
        %v1613 = vrot.slane %v1560, 7
        %v1614 = vrot.slane %v1613, 2
        %v1615 = vrot.slane %v1563, 7
        %v1616 = vrot.slane %v1615, 2
        %v1617 = vrot.slane %v1575, 7
        %v1618 = vrot.slane %v1617, 2
        %v1619 = vrot.slane %v1578, 7
        %v1620 = vrot.slane %v1619, 2
        %v1621 = vrot.slane %v1581, 7
        %v1622 = vrot.slane %v1621, 2
        %v1623 = vrot.slane %v1593, 7
        %v1624 = vrot.slane %v1623, 2
        %v1625 = vrot.slane %v1596, 7
        %v1626 = vrot.slane %v1625, 2
        %v1627 = vrot.slane %v1599, 7
        %v1628 = vrot.slane %v1627, 2
        %v1638 = vmax.f32 %v1557, %v1612
        %v1639 = vmax.f32 %v1560, %v1614
        %v1640 = vmax.f32 %v1563, %v1616
        %v1641 = vmax.f32 %v1575, %v1618
        %v1642 = vmax.f32 %v1578, %v1620
        %v1643 = vmax.f32 %v1581, %v1622
        %v1644 = vmax.f32 %v1593, %v1624
        %v1645 = vmax.f32 %v1596, %v1626
        %v1646 = vmax.f32 %v1599, %v1628
        %v1656 = vrot.slane %v1558, 7
        %v1657 = vrot.slane %v1561, 7
        %v1658 = vrot.slane %v1564, 7
        %v1659 = vrot.slane %v1576, 7
        %v1660 = vrot.slane %v1579, 7
        %v1661 = vrot.slane %v1582, 7
        %v1662 = vrot.slane %v1594, 7
        %v1663 = vrot.slane %v1597, 7
        %v1664 = vrot.slane %v1600, 7
        %v1674 = vmax.f32 %v1557, %v1656
        %v1675 = vmax.f32 %v1560, %v1657
        %v1676 = vmax.f32 %v1563, %v1658
        %v1677 = vmax.f32 %v1575, %v1659
        %v1678 = vmax.f32 %v1578, %v1660
        %v1679 = vmax.f32 %v1581, %v1661
        %v1680 = vmax.f32 %v1593, %v1662
        %v1681 = vmax.f32 %v1596, %v1663
        %v1682 = vmax.f32 %v1599, %v1664
        %v1683 = vmax.f32 %v1674, %v1558
        %v1684 = vmax.f32 %v1675, %v1561
        %v1685 = vmax.f32 %v1676, %v1564
        %v1686 = vmax.f32 %v1677, %v1576
        %v1687 = vmax.f32 %v1678, %v1579
        %v1688 = vmax.f32 %v1679, %v1582
        %v1689 = vmax.f32 %v1680, %v1594
        %v1690 = vmax.f32 %v1681, %v1597
        %v1691 = vmax.f32 %v1682, %v1600
        %v1701 = vrot.slane %v1559, 7
        %v1702 = vrot.slane %v1562, 7
        %v1703 = vrot.slane %v1565, 7
        %v1704 = vrot.slane %v1577, 7
        %v1705 = vrot.slane %v1580, 7
        %v1706 = vrot.slane %v1583, 7
        %v1707 = vrot.slane %v1595, 7
        %v1708 = vrot.slane %v1598, 7
        %v1709 = vrot.slane %v1601, 7
        %v1719 = vmax.f32 %v1558, %v1701
        %v1720 = vmax.f32 %v1561, %v1702
        %v1721 = vmax.f32 %v1564, %v1703
        %v1722 = vmax.f32 %v1576, %v1704
        %v1723 = vmax.f32 %v1579, %v1705
        %v1724 = vmax.f32 %v1582, %v1706
        %v1725 = vmax.f32 %v1594, %v1707
        %v1726 = vmax.f32 %v1597, %v1708
        %v1727 = vmax.f32 %v1600, %v1709
        %v1728 = vmax.f32 %v1719, %v1559
        %v1729 = vmax.f32 %v1720, %v1562
        %v1730 = vmax.f32 %v1721, %v1565
        %v1731 = vmax.f32 %v1722, %v1577
        %v1732 = vmax.f32 %v1723, %v1580
        %v1733 = vmax.f32 %v1724, %v1583
        %v1734 = vmax.f32 %v1725, %v1595
        %v1735 = vmax.f32 %v1726, %v1598
        %v1736 = vmax.f32 %v1727, %v1601
        %v1746 = vrot.slane %v1683, 7
        %v1747 = vrot.slane %v1746, 2
        %v1748 = vrot.slane %v1684, 7
        %v1749 = vrot.slane %v1748, 2
        %v1750 = vrot.slane %v1685, 7
        %v1751 = vrot.slane %v1750, 2
        %v1752 = vrot.slane %v1686, 7
        %v1753 = vrot.slane %v1752, 2
        %v1754 = vrot.slane %v1687, 7
        %v1755 = vrot.slane %v1754, 2
        %v1756 = vrot.slane %v1688, 7
        %v1757 = vrot.slane %v1756, 2
        %v1758 = vrot.slane %v1689, 7
        %v1759 = vrot.slane %v1758, 2
        %v1760 = vrot.slane %v1690, 7
        %v1761 = vrot.slane %v1760, 2
        %v1762 = vrot.slane %v1691, 7
        %v1763 = vrot.slane %v1762, 2
        %v1773 = vadd.f32 %v1638, %v1747
        %v1774 = vadd.f32 %v1639, %v1749
        %v1775 = vadd.f32 %v1640, %v1751
        %v1776 = vadd.f32 %v1641, %v1753
        %v1777 = vadd.f32 %v1642, %v1755
        %v1778 = vadd.f32 %v1643, %v1757
        %v1779 = vadd.f32 %v1644, %v1759
        %v1780 = vadd.f32 %v1645, %v1761
        %v1781 = vadd.f32 %v1646, %v1763
        %v1791 = vrot.slane %v1728, 7
        %v1792 = vrot.slane %v1791, 2
        %v1793 = vrot.slane %v1729, 7
        %v1794 = vrot.slane %v1793, 2
        %v1795 = vrot.slane %v1730, 7
        %v1796 = vrot.slane %v1795, 2
        %v1797 = vrot.slane %v1731, 7
        %v1798 = vrot.slane %v1797, 2
        %v1799 = vrot.slane %v1732, 7
        %v1800 = vrot.slane %v1799, 2
        %v1801 = vrot.slane %v1733, 7
        %v1802 = vrot.slane %v1801, 2
        %v1803 = vrot.slane %v1734, 7
        %v1804 = vrot.slane %v1803, 2
        %v1805 = vrot.slane %v1735, 7
        %v1806 = vrot.slane %v1805, 2
        %v1807 = vrot.slane %v1736, 7
        %v1808 = vrot.slane %v1807, 2
        %v1818 = vadd.f32 %v1773, %v1792
        %v1819 = vadd.f32 %v1774, %v1794
        %v1820 = vadd.f32 %v1775, %v1796
        %v1821 = vadd.f32 %v1776, %v1798
        %v1822 = vadd.f32 %v1777, %v1800
        %v1823 = vadd.f32 %v1778, %v1802
        %v1824 = vadd.f32 %v1779, %v1804
        %v1825 = vadd.f32 %v1780, %v1806
        %v1826 = vadd.f32 %v1781, %v1808
        %v1836 = vlaneseq
        %v1837 = vshrl.u32 %v1836, 7
        %v1838 = vsub.s32 0, %v1837
        %v1839 = vrot.slane %v1818, %v1838
        %v1840 = vlaneseq
        %v1841 = vshrl.u32 %v1840, 7
        %v1842 = vsub.s32 0, %v1841
        %v1843 = vrot.slane %v1819, %v1842
        %v1844 = vlaneseq
        %v1845 = vshrl.u32 %v1844, 7
        %v1846 = vsub.s32 0, %v1845
        %v1847 = vrot.slane %v1820, %v1846
        %v1848 = vlaneseq
        %v1849 = vshrl.u32 %v1848, 7
        %v1850 = vsub.s32 0, %v1849
        %v1851 = vrot.slane %v1821, %v1850
        %v1852 = vlaneseq
        %v1853 = vshrl.u32 %v1852, 7
        %v1854 = vsub.s32 0, %v1853
        %v1855 = vrot.slane %v1822, %v1854
        %v1856 = vlaneseq
        %v1857 = vshrl.u32 %v1856, 7
        %v1858 = vsub.s32 0, %v1857
        %v1859 = vrot.slane %v1823, %v1858
        %v1860 = vlaneseq
        %v1861 = vshrl.u32 %v1860, 7
        %v1862 = vsub.s32 0, %v1861
        %v1863 = vrot.slane %v1824, %v1862
        %v1864 = vlaneseq
        %v1865 = vshrl.u32 %v1864, 7
        %v1866 = vsub.s32 0, %v1865
        %v1867 = vrot.slane %v1825, %v1866
        %v1868 = vlaneseq
        %v1869 = vshrl.u32 %v1868, 7
        %v1870 = vsub.s32 0, %v1869
        %v1871 = vrot.slane %v1826, %v1870
        %vm1872 = vcmask 1041409
        %v1873 = vsel %vm1872, %v1843, %v1839
        %vm1874 = vcmask 1042434
        %v1875 = vsel %vm1874, %v1847, %v1873
        %vm1876 = vcmask 1043459
        %v1877 = vsel %vm1876, %v1851, %v1875
        %vm1878 = vcmask 1044484
        %v1879 = vsel %vm1878, %v1855, %v1877
        %vm1880 = vcmask 1045509
        %v1881 = vsel %vm1880, %v1859, %v1879
        %vm1882 = vcmask 1046534
        %v1883 = vsel %vm1882, %v1863, %v1881
        %vm1884 = vcmask 1047559
        %v1885 = vsel %vm1884, %v1867, %v1883
        %vm1888 = vcmask 523264
        %v1889 = vsel %vm1888, %v1885, 0.0
        %vm1890 = vcmask 516096
        %v1891 = vsel %vm1890, %v1871, 0.0
        %v1892 = vadd.f32 %v1889, %v1891
        %v1893 = vrot.slane %v1892, 4
        %v1894 = vadd.f32 %v1892, %v1893
        %v1895 = vrot.slane %v1894, 2
        %v1896 = vadd.f32 %v1894, %v1895
        %v1897 = vrot.slane %v1896, 1
        %v1898 = vadd.f32 %v1896, %v1897
        %v1899 = vmul.f32 %v1898, 0.037037037
        %v1900 = vpack.c.bf16 %v1899, %v1899
        %v1901 = vld [vmem:[%s4] sm:$0xff]
        %v1902 = vld [vmem:[%s4 + $0x8] sm:$0xff]
        %v1903 = vld [vmem:[%s4 + $0x10] sm:$0xff]
        %v1904 = vld [vmem:[%s4 + $0x18] sm:$0xff]
        %v1905 = vld [vmem:[%s4 + $0x20] sm:$0xff]
        %v1906 = vld [vmem:[%s4 + $0x28] sm:$0xff]
        %v1907 = vld [vmem:[%s4 + $0x30] sm:$0xff]
        %v1908 = vld [vmem:[%s4 + $0x38] sm:$0xff]
        %v1909 = vld [vmem:[%s4 + $0x40] sm:$0xff]
        %v1910 = vld [vmem:[%s4 + $0x48] sm:$0xff]
        %v1911 = vld [vmem:[%s4 + $0x50] sm:$0xff]
        %v1912 = vld [vmem:[%s4 + $0x58] sm:$0xff]
        %v1913 = vld [vmem:[%s4 + $0x60] sm:$0xff]
        %v1914 = vld [vmem:[%s4 + $0x68] sm:$0xff]
        %v1915 = vld [vmem:[%s4 + $0x70] sm:$0xff]
        %v1916 = vld [vmem:[%s4 + $0x78] sm:$0xff]
        %v1917 = vld [vmem:[%s5] sm:$0xf]
        %v1934 = vunpack.c.l.b16 %v1901
        %v1935 = vunpack.c.h.b16 %v1901
        %v1936 = vunpack.c.l.b16 %v1902
        %v1937 = vunpack.c.h.b16 %v1902
        %v1938 = vunpack.c.l.b16 %v1903
        %v1939 = vunpack.c.h.b16 %v1903
        %v1940 = vunpack.c.l.b16 %v1904
        %v1941 = vunpack.c.h.b16 %v1904
        %v1942 = vunpack.c.l.b16 %v1905
        %v1943 = vunpack.c.h.b16 %v1905
        %v1944 = vunpack.c.l.b16 %v1906
        %v1945 = vunpack.c.h.b16 %v1906
        %v1946 = vunpack.c.l.b16 %v1907
        %v1947 = vunpack.c.h.b16 %v1907
        %v1948 = vunpack.c.l.b16 %v1908
        %v1949 = vunpack.c.h.b16 %v1908
        %v1950 = vunpack.c.l.b16 %v1909
        %v1951 = vunpack.c.h.b16 %v1909
        %v1952 = vunpack.c.l.b16 %v1910
        %v1953 = vunpack.c.h.b16 %v1910
        %v1954 = vunpack.c.l.b16 %v1911
        %v1955 = vunpack.c.h.b16 %v1911
        %v1956 = vunpack.c.l.b16 %v1912
        %v1957 = vunpack.c.h.b16 %v1912
        %v1958 = vunpack.c.l.b16 %v1913
        %v1959 = vunpack.c.h.b16 %v1913
        %v1960 = vunpack.c.l.b16 %v1914
        %v1961 = vunpack.c.h.b16 %v1914
        %v1962 = vunpack.c.l.b16 %v1915
        %v1963 = vunpack.c.h.b16 %v1915
        %v1964 = vunpack.c.l.b16 %v1916
        %v1965 = vunpack.c.h.b16 %v1916
        %v1966 = vpack.c.b16 %v1938, %v1934
        %v1967 = vpack.c.b16 %v1939, %v1935
        %v1968 = vpack.c.b16 %v1940, %v1936
        %v1969 = vpack.c.b16 %v1941, %v1937
        %v1970 = vpack.c.b16 %v1946, %v1942
        %v1971 = vpack.c.b16 %v1947, %v1943
        %v1972 = vpack.c.b16 %v1948, %v1944
        %v1973 = vpack.c.b16 %v1949, %v1945
        %v1974 = vpack.c.b16 %v1954, %v1950
        %v1975 = vpack.c.b16 %v1955, %v1951
        %v1976 = vpack.c.b16 %v1956, %v1952
        %v1977 = vpack.c.b16 %v1957, %v1953
        %v1978 = vpack.c.b16 %v1962, %v1958
        %v1979 = vpack.c.b16 %v1963, %v1959
        %v1980 = vpack.c.b16 %v1964, %v1960
        %v1981 = vpack.c.b16 %v1965, %v1961
        %v1999 = vlaneseq
        %v2000 = vshrl.u32 %v1999, 7
        %v2001 = vsub.s32 0, %v2000
        %v2002 = vrot.slane %v1917, %v2001
        %v2003 = vlaneseq
        %v2004 = vshrl.u32 %v2003, 7
        %v2005 = vsub.s32 1, %v2004
        %v2006 = vrot.slane %v1917, %v2005
        %v2007 = vlaneseq
        %v2008 = vshrl.u32 %v2007, 7
        %v2009 = vsub.s32 2, %v2008
        %v2010 = vrot.slane %v1917, %v2009
        %v2011 = vlaneseq
        %v2012 = vshrl.u32 %v2011, 7
        %v2013 = vsub.s32 3, %v2012
        %v2014 = vrot.slane %v1917, %v2013
        %v2020 = vsel %vm1888, %v1900, 0
        %2022 = vmatprep.subr.bf16.mxu0 0
        %2023 = vmatpush1.bf16.msra.mxu0 0
        %2024 = vmatprep.subr.bf16.mxu0 0
        %2025 = vmatpush1.bf16.msra.mxu0 0
        %2026 = vmatprep.subr.bf16.mxu0 0
        %2027 = vmatpush1.bf16.msra.mxu0 0
        %2028 = vmatprep.subr.bf16.mxu0 0
        %2029 = vmatpush1.bf16.msra.mxu0 0
        %2030 = vmatprep.subr.bf16.mxu0 %v1979
        %2031 = vmatpush1.bf16.msra.mxu0 %v1978
        %2032 = vmatprep.subr.bf16.mxu0 %v1975
        %2033 = vmatpush1.bf16.msra.mxu0 %v1974
        %2034 = vmatprep.subr.bf16.mxu0 %v1971
        %2035 = vmatpush1.bf16.msra.mxu0 %v1970
        %2036 = vmatprep.subr.bf16.mxu0 %v1967
        %2037 = vmatpush1.bf16.msra.mxu0 %v1966
        %2038 = vmatprep.subr.bf16.mxu0 0
        %2039 = vmatpush2.bf16.msra.mxu0 0
        %2040 = vmatprep.subr.bf16.mxu0 0
        %2041 = vmatpush2.bf16.msra.mxu0 0
        %2042 = vmatprep.subr.bf16.mxu0 0
        %2043 = vmatpush2.bf16.msra.mxu0 0
        %2044 = vmatprep.subr.bf16.mxu0 0
        %2045 = vmatpush2.bf16.msra.mxu0 0
        %2046 = vmatprep.subr.bf16.mxu0 0
        %2047 = vmatpush2.bf16.msra.mxu0 0
        %2048 = vmatprep.subr.bf16.mxu0 0
        %2049 = vmatpush2.bf16.msra.mxu0 0
        %2050 = vmatprep.subr.bf16.mxu0 0
        %2051 = vmatpush2.bf16.msra.mxu0 0
        %2052 = vmatprep.subr.bf16.mxu0 0
        %2053 = vmatpush2.bf16.msra.mxu0 0
        %2054 = vmatprep.mubr.bf16.mxu0 0
        %2055 = vmatmul.mubr.bf16.gmra.mxu0 %v2020
        %v2056 = vpop.f32.mrf.mxu0
        %v2057 = vadd.f32 %v2002, %v2056
        %v2058 = vpop.f32.mrf.mxu0
        %v2059 = vadd.f32 %v2006, %v2058
        %v2060 = vpop.f32.mrf.mxu0
        %v2061 = vpop.f32.mrf.mxu0
        %2062 = vdwg.mxu0
        %2063 = vmatprep.subr.bf16.mxu0 0
        %2064 = vmatpush1.bf16.msra.mxu0 0
        %2065 = vmatprep.subr.bf16.mxu0 0
        %2066 = vmatpush1.bf16.msra.mxu0 0
        %2067 = vmatprep.subr.bf16.mxu0 0
        %2068 = vmatpush1.bf16.msra.mxu0 0
        %2069 = vmatprep.subr.bf16.mxu0 0
        %2070 = vmatpush1.bf16.msra.mxu0 0
        %2071 = vmatprep.subr.bf16.mxu0 %v1981
        %2072 = vmatpush1.bf16.msra.mxu0 %v1980
        %2073 = vmatprep.subr.bf16.mxu0 %v1977
        %2074 = vmatpush1.bf16.msra.mxu0 %v1976
        %2075 = vmatprep.subr.bf16.mxu0 %v1973
        %2076 = vmatpush1.bf16.msra.mxu0 %v1972
        %2077 = vmatprep.subr.bf16.mxu0 %v1969
        %2078 = vmatpush1.bf16.msra.mxu0 %v1968
        %2079 = vmatprep.subr.bf16.mxu0 0
        %2080 = vmatpush2.bf16.msra.mxu0 0
        %2081 = vmatprep.subr.bf16.mxu0 0
        %2082 = vmatpush2.bf16.msra.mxu0 0
        %2083 = vmatprep.subr.bf16.mxu0 0
        %2084 = vmatpush2.bf16.msra.mxu0 0
        %2085 = vmatprep.subr.bf16.mxu0 0
        %2086 = vmatpush2.bf16.msra.mxu0 0
        %2087 = vmatprep.subr.bf16.mxu0 0
        %2088 = vmatpush2.bf16.msra.mxu0 0
        %2089 = vmatprep.subr.bf16.mxu0 0
        %2090 = vmatpush2.bf16.msra.mxu0 0
        %2091 = vmatprep.subr.bf16.mxu0 0
        %2092 = vmatpush2.bf16.msra.mxu0 0
        %2093 = vmatprep.subr.bf16.mxu0 0
        %2094 = vmatpush2.bf16.msra.mxu0 0
        %2095 = vmatprep.mubr.bf16.mxu0 0
        %2096 = vmatmul.mubr.bf16.gmra.mxu0 %v2020
        %v2097 = vpop.f32.mrf.mxu0
        %v2098 = vadd.f32 %v2010, %v2097
        %v2099 = vpop.f32.mrf.mxu0
        %v2100 = vadd.f32 %v2014, %v2099
        %v2101 = vpop.f32.mrf.mxu0
        %v2102 = vpop.f32.mrf.mxu0
        %2103 = vdwg.mxu0
        %v2104 = vpack.c.bf16 %v2057, %v2057
        %v2105 = vpack.c.bf16 %v2059, %v2059
        %v2106 = vpack.c.bf16 %v2098, %v2098
        %v2107 = vpack.c.bf16 %v2100, %v2100
        %v2108 = vld [vmem:[%s6] sm:$0xf]
        %v2109 = vld [vmem:[%s6 + $0x4] sm:$0xf]
        %v2110 = vld [vmem:[%s6 + $0x8] sm:$0xf]
        %v2111 = vld [vmem:[%s6 + $0xc] sm:$0xf]
        %v2112 = vld [vmem:[%s6 + $0x10] sm:$0xf]
        %v2113 = vld [vmem:[%s6 + $0x14] sm:$0xf]
        %v2114 = vld [vmem:[%s6 + $0x18] sm:$0xf]
        %v2115 = vld [vmem:[%s6 + $0x1c] sm:$0xf]
        %v2116 = vld [vmem:[%s6 + $0x20] sm:$0xf]
        %v2117 = vld [vmem:[%s6 + $0x24] sm:$0xf]
        %v2118 = vld [vmem:[%s6 + $0x28] sm:$0xf]
        %v2119 = vld [vmem:[%s6 + $0x2c] sm:$0xf]
        %v2120 = vld [vmem:[%s6 + $0x30] sm:$0xf]
        %v2121 = vld [vmem:[%s6 + $0x34] sm:$0xf]
        %v2122 = vld [vmem:[%s6 + $0x38] sm:$0xf]
        %v2123 = vld [vmem:[%s6 + $0x3c] sm:$0xf]
        %v2124 = vld [vmem:[%s6 + $0x40] sm:$0xf]
        %v2125 = vld [vmem:[%s6 + $0x44] sm:$0xf]
        %v2126 = vld [vmem:[%s6 + $0x48] sm:$0xf]
        %v2127 = vld [vmem:[%s6 + $0x4c] sm:$0xf]
        %v2128 = vld [vmem:[%s6 + $0x50] sm:$0xf]
        %v2129 = vld [vmem:[%s6 + $0x54] sm:$0xf]
        %v2130 = vld [vmem:[%s6 + $0x58] sm:$0xf]
        %v2131 = vld [vmem:[%s6 + $0x5c] sm:$0xf]
        %v2132 = vld [vmem:[%s6 + $0x60] sm:$0xf]
        %v2133 = vld [vmem:[%s6 + $0x64] sm:$0xf]
        %v2134 = vld [vmem:[%s6 + $0x68] sm:$0xf]
        %v2135 = vld [vmem:[%s6 + $0x6c] sm:$0xf]
        %v2136 = vld [vmem:[%s6 + $0x70] sm:$0xf]
        %v2137 = vld [vmem:[%s6 + $0x74] sm:$0xf]
        %v2138 = vld [vmem:[%s6 + $0x78] sm:$0xf]
        %v2139 = vld [vmem:[%s6 + $0x7c] sm:$0xf]
        %v2140 = vld [vmem:[%s6 + $0x80] sm:$0xf]
        %v2141 = vld [vmem:[%s6 + $0x84] sm:$0xf]
        %v2142 = vld [vmem:[%s6 + $0x88] sm:$0xf]
        %v2143 = vld [vmem:[%s6 + $0x8c] sm:$0xf]
        %v2144 = vld [vmem:[%s6 + $0x90] sm:$0xf]
        %v2145 = vld [vmem:[%s6 + $0x94] sm:$0xf]
        %v2146 = vld [vmem:[%s6 + $0x98] sm:$0xf]
        %v2147 = vld [vmem:[%s6 + $0x9c] sm:$0xf]
        %v2148 = vld [vmem:[%s6 + $0xa0] sm:$0xf]
        %v2149 = vld [vmem:[%s6 + $0xa4] sm:$0xf]
        %v2150 = vld [vmem:[%s6 + $0xa8] sm:$0xf]
        %v2151 = vld [vmem:[%s6 + $0xac] sm:$0xf]
        %v2152 = vld [vmem:[%s6 + $0xb0] sm:$0xf]
        %v2153 = vld [vmem:[%s6 + $0xb4] sm:$0xf]
        %v2154 = vld [vmem:[%s6 + $0xb8] sm:$0xf]
        %v2155 = vld [vmem:[%s6 + $0xbc] sm:$0xf]
        %v2156 = vld [vmem:[%s6 + $0xc0] sm:$0xf]
        %v2157 = vld [vmem:[%s6 + $0xc4] sm:$0xf]
        %v2158 = vld [vmem:[%s6 + $0xc8] sm:$0xf]
        %v2159 = vld [vmem:[%s6 + $0xcc] sm:$0xf]
        %v2160 = vld [vmem:[%s6 + $0xd0] sm:$0xf]
        %v2161 = vld [vmem:[%s6 + $0xd4] sm:$0xf]
        %v2162 = vld [vmem:[%s6 + $0xd8] sm:$0xf]
        %v2163 = vld [vmem:[%s6 + $0xdc] sm:$0xf]
        %v2164 = vld [vmem:[%s6 + $0xe0] sm:$0xf]
        %v2165 = vld [vmem:[%s6 + $0xe4] sm:$0xf]
        %v2166 = vld [vmem:[%s6 + $0xe8] sm:$0xf]
        %v2167 = vld [vmem:[%s6 + $0xec] sm:$0xf]
        %v2168 = vld [vmem:[%s6 + $0xf0] sm:$0xf]
        %v2169 = vld [vmem:[%s6 + $0xf4] sm:$0xf]
        %v2170 = vld [vmem:[%s6 + $0xf8] sm:$0xf]
        %v2171 = vld [vmem:[%s6 + $0xfc] sm:$0xf]
        %v2172 = vld [vmem:[%s7] sm:$0x1]
        %v2237 = vunpack.c.l.b16 %v2108
        %v2238 = vunpack.c.l.b16 %v2109
        %v2239 = vunpack.c.l.b16 %v2110
        %v2240 = vunpack.c.l.b16 %v2111
        %v2241 = vunpack.c.l.b16 %v2112
        %v2242 = vunpack.c.l.b16 %v2113
        %v2243 = vunpack.c.l.b16 %v2114
        %v2244 = vunpack.c.l.b16 %v2115
        %v2245 = vunpack.c.l.b16 %v2116
        %v2246 = vunpack.c.l.b16 %v2117
        %v2247 = vunpack.c.l.b16 %v2118
        %v2248 = vunpack.c.l.b16 %v2119
        %v2249 = vunpack.c.l.b16 %v2120
        %v2250 = vunpack.c.l.b16 %v2121
        %v2251 = vunpack.c.l.b16 %v2122
        %v2252 = vunpack.c.l.b16 %v2123
        %v2253 = vunpack.c.l.b16 %v2124
        %v2254 = vunpack.c.l.b16 %v2125
        %v2255 = vunpack.c.l.b16 %v2126
        %v2256 = vunpack.c.l.b16 %v2127
        %v2257 = vunpack.c.l.b16 %v2128
        %v2258 = vunpack.c.l.b16 %v2129
        %v2259 = vunpack.c.l.b16 %v2130
        %v2260 = vunpack.c.l.b16 %v2131
        %v2261 = vunpack.c.l.b16 %v2132
        %v2262 = vunpack.c.l.b16 %v2133
        %v2263 = vunpack.c.l.b16 %v2134
        %v2264 = vunpack.c.l.b16 %v2135
        %v2265 = vunpack.c.l.b16 %v2136
        %v2266 = vunpack.c.l.b16 %v2137
        %v2267 = vunpack.c.l.b16 %v2138
        %v2268 = vunpack.c.l.b16 %v2139
        %v2269 = vunpack.c.l.b16 %v2140
        %v2270 = vunpack.c.l.b16 %v2141
        %v2271 = vunpack.c.l.b16 %v2142
        %v2272 = vunpack.c.l.b16 %v2143
        %v2273 = vunpack.c.l.b16 %v2144
        %v2274 = vunpack.c.l.b16 %v2145
        %v2275 = vunpack.c.l.b16 %v2146
        %v2276 = vunpack.c.l.b16 %v2147
        %v2277 = vunpack.c.l.b16 %v2148
        %v2278 = vunpack.c.l.b16 %v2149
        %v2279 = vunpack.c.l.b16 %v2150
        %v2280 = vunpack.c.l.b16 %v2151
        %v2281 = vunpack.c.l.b16 %v2152
        %v2282 = vunpack.c.l.b16 %v2153
        %v2283 = vunpack.c.l.b16 %v2154
        %v2284 = vunpack.c.l.b16 %v2155
        %v2285 = vunpack.c.l.b16 %v2156
        %v2286 = vunpack.c.l.b16 %v2157
        %v2287 = vunpack.c.l.b16 %v2158
        %v2288 = vunpack.c.l.b16 %v2159
        %v2289 = vunpack.c.l.b16 %v2160
        %v2290 = vunpack.c.l.b16 %v2161
        %v2291 = vunpack.c.l.b16 %v2162
        %v2292 = vunpack.c.l.b16 %v2163
        %v2293 = vunpack.c.l.b16 %v2164
        %v2294 = vunpack.c.l.b16 %v2165
        %v2295 = vunpack.c.l.b16 %v2166
        %v2296 = vunpack.c.l.b16 %v2167
        %v2297 = vunpack.c.l.b16 %v2168
        %v2298 = vunpack.c.l.b16 %v2169
        %v2299 = vunpack.c.l.b16 %v2170
        %v2300 = vunpack.c.l.b16 %v2171
        %v2301 = vpack.c.b16 %v2238, %v2237
        %v2302 = vpack.c.b16 %v2240, %v2239
        %v2303 = vpack.c.b16 %v2242, %v2241
        %v2304 = vpack.c.b16 %v2244, %v2243
        %v2305 = vpack.c.b16 %v2246, %v2245
        %v2306 = vpack.c.b16 %v2248, %v2247
        %v2307 = vpack.c.b16 %v2250, %v2249
        %v2308 = vpack.c.b16 %v2252, %v2251
        %v2309 = vpack.c.b16 %v2254, %v2253
        %v2310 = vpack.c.b16 %v2256, %v2255
        %v2311 = vpack.c.b16 %v2258, %v2257
        %v2312 = vpack.c.b16 %v2260, %v2259
        %v2313 = vpack.c.b16 %v2262, %v2261
        %v2314 = vpack.c.b16 %v2264, %v2263
        %v2315 = vpack.c.b16 %v2266, %v2265
        %v2316 = vpack.c.b16 %v2268, %v2267
        %v2317 = vpack.c.b16 %v2270, %v2269
        %v2318 = vpack.c.b16 %v2272, %v2271
        %v2319 = vpack.c.b16 %v2274, %v2273
        %v2320 = vpack.c.b16 %v2276, %v2275
        %v2321 = vpack.c.b16 %v2278, %v2277
        %v2322 = vpack.c.b16 %v2280, %v2279
        %v2323 = vpack.c.b16 %v2282, %v2281
        %v2324 = vpack.c.b16 %v2284, %v2283
        %v2325 = vpack.c.b16 %v2286, %v2285
        %v2326 = vpack.c.b16 %v2288, %v2287
        %v2327 = vpack.c.b16 %v2290, %v2289
        %v2328 = vpack.c.b16 %v2292, %v2291
        %v2329 = vpack.c.b16 %v2294, %v2293
        %v2330 = vpack.c.b16 %v2296, %v2295
        %v2331 = vpack.c.b16 %v2298, %v2297
        %v2332 = vpack.c.b16 %v2300, %v2299
        %2365 = vmatprep.subr.bf16.mxu0 0
        %2366 = vmatpush1.bf16.msra.mxu0 %v2308
        %2367 = vmatprep.subr.bf16.mxu0 0
        %2368 = vmatpush1.bf16.msra.mxu0 %v2307
        %2369 = vmatprep.subr.bf16.mxu0 0
        %2370 = vmatpush1.bf16.msra.mxu0 %v2306
        %2371 = vmatprep.subr.bf16.mxu0 0
        %2372 = vmatpush1.bf16.msra.mxu0 %v2305
        %2373 = vmatprep.subr.bf16.mxu0 0
        %2374 = vmatpush1.bf16.msra.mxu0 %v2304
        %2375 = vmatprep.subr.bf16.mxu0 0
        %2376 = vmatpush1.bf16.msra.mxu0 %v2303
        %2377 = vmatprep.subr.bf16.mxu0 0
        %2378 = vmatpush1.bf16.msra.mxu0 %v2302
        %2379 = vmatprep.subr.bf16.mxu0 0
        %2380 = vmatpush1.bf16.msra.mxu0 %v2301
        %2381 = vmatprep.subr.bf16.mxu0 0
        %2382 = vmatpush2.bf16.msra.mxu0 %v2316
        %2383 = vmatprep.subr.bf16.mxu0 0
        %2384 = vmatpush2.bf16.msra.mxu0 %v2315
        %2385 = vmatprep.subr.bf16.mxu0 0
        %2386 = vmatpush2.bf16.msra.mxu0 %v2314
        %2387 = vmatprep.subr.bf16.mxu0 0
        %2388 = vmatpush2.bf16.msra.mxu0 %v2313
        %2389 = vmatprep.subr.bf16.mxu0 0
        %2390 = vmatpush2.bf16.msra.mxu0 %v2312
        %2391 = vmatprep.subr.bf16.mxu0 0
        %2392 = vmatpush2.bf16.msra.mxu0 %v2311
        %2393 = vmatprep.subr.bf16.mxu0 0
        %2394 = vmatpush2.bf16.msra.mxu0 %v2310
        %2395 = vmatprep.subr.bf16.mxu0 0
        %2396 = vmatpush2.bf16.msra.mxu0 %v2309
        %2397 = vmatprep.mubr.bf16.mxu0 %v2105
        %2398 = vmatmul.mubr.bf16.gmra.mxu0 %v2104
        %v2399 = vpop.f32.mrf.mxu0
        %v2400 = vadd.f32 %v2172, %v2399
        %v2401 = vpop.f32.mrf.mxu0
        %v2402 = vpop.f32.mrf.mxu0
        %v2403 = vpop.f32.mrf.mxu0
        %2404 = vdwg.mxu0
        %2405 = vmatprep.subr.bf16.mxu0 0
        %2406 = vmatpush1.bf16.msra.mxu0 %v2324
        %2407 = vmatprep.subr.bf16.mxu0 0
        %2408 = vmatpush1.bf16.msra.mxu0 %v2323
        %2409 = vmatprep.subr.bf16.mxu0 0
        %2410 = vmatpush1.bf16.msra.mxu0 %v2322
        %2411 = vmatprep.subr.bf16.mxu0 0
        %2412 = vmatpush1.bf16.msra.mxu0 %v2321
        %2413 = vmatprep.subr.bf16.mxu0 0
        %2414 = vmatpush1.bf16.msra.mxu0 %v2320
        %2415 = vmatprep.subr.bf16.mxu0 0
        %2416 = vmatpush1.bf16.msra.mxu0 %v2319
        %2417 = vmatprep.subr.bf16.mxu0 0
        %2418 = vmatpush1.bf16.msra.mxu0 %v2318
        %2419 = vmatprep.subr.bf16.mxu0 0
        %2420 = vmatpush1.bf16.msra.mxu0 %v2317
        %2421 = vmatprep.subr.bf16.mxu0 0
        %2422 = vmatpush2.bf16.msra.mxu0 %v2332
        %2423 = vmatprep.subr.bf16.mxu0 0
        %2424 = vmatpush2.bf16.msra.mxu0 %v2331
        %2425 = vmatprep.subr.bf16.mxu0 0
        %2426 = vmatpush2.bf16.msra.mxu0 %v2330
        %2427 = vmatprep.subr.bf16.mxu0 0
        %2428 = vmatpush2.bf16.msra.mxu0 %v2329
        %2429 = vmatprep.subr.bf16.mxu0 0
        %2430 = vmatpush2.bf16.msra.mxu0 %v2328
        %2431 = vmatprep.subr.bf16.mxu0 0
        %2432 = vmatpush2.bf16.msra.mxu0 %v2327
        %2433 = vmatprep.subr.bf16.mxu0 0
        %2434 = vmatpush2.bf16.msra.mxu0 %v2326
        %2435 = vmatprep.subr.bf16.mxu0 0
        %2436 = vmatpush2.bf16.msra.mxu0 %v2325
        %2437 = vmatprep.mubr.bf16.mxu0 %v2107
        %2438 = vmatmul.mubr.bf16.gmra.mxu0 %v2106
        %v2439 = vpop.f32.mrf.mxu0
        %v2440 = vadd.f32 %v2400, %v2439
        %v2441 = vpop.f32.mrf.mxu0
        %v2442 = vpop.f32.mrf.mxu0
        %v2443 = vpop.f32.mrf.mxu0
        %2444 = vdwg.mxu0
        %v2449 = vcombine.low %v2057, %v2059
        %v2450 = vcombine.low %v2098, %v2100
        %v2452 = vunpack.c.l.s4 1966171168
        %v2453 = vunpack.c.0.s8 %v2452
        %v2454 = vlaneseq
        %v2455 = vshrl.u32 %v2454, 7
        %v2456 = vsub.s32 %v2453, %v2455
        %v2457 = vrot.slane %v2449, %v2456
        %v2459 = vunpack.c.l.s4 1966171168
        %v2460 = vunpack.c.0.s8 %v2459
        %v2461 = vlaneseq
        %v2462 = vshrl.u32 %v2461, 7
        %v2463 = vsub.s32 %v2460, %v2462
        %v2464 = vrot.slane %v2450, %v2463
        %v2465 = vcombine.low %v2457, %v2464
        %v2467 = vunpack.c.l.s4 1966171168
        %v2468 = vunpack.c.0.s8 %v2467
        %v2469 = vlaneseq
        %v2470 = vshrl.u32 %v2469, 7
        %v2471 = vsub.s32 %v2468, %v2470
        %v2472 = vrot.slane %v2465, %v2471
        %v2474 = vlaneseq
        %vm2475 = vcmp.ge.s32.totalorder %v2474, 0
        %vm2476 = vcmp.lt.s32.totalorder %v2474, 512
        %vm2477 = vmand %vm2475, %vm2476
        %2478 = vst.msk [vmem:[%s340] sm:$0xf] %vm2477, %v2472
        %2479 = vst [vmem:[%s325] sm:$0x1] %v2440
        %s2480 = sand.u32 %s205, 1
        %s2481 = scalar_lea.sflag [#allocation3], %s2480
        %s2482 = sand.u32 %s205, 1
        %s2483 = scalar_lea.vmem [#allocation2], %s2482
        %p2484 = scmp.lt.s32.totalorder %s24, 1
        %s2485 = scalar_select %p2484, %s24, 1
        %s2486 = smul.addr %s2485, 4
        %s2487 = scalar_lea.vmem %s9, %s2486
        // Predicated region
        $region53: #{resnet_l0_forward.1} parent=51 // pred_check
          %p2488 = pneg %p215
        $region54: #{resnet_l0_forward.1} parent=51 // pred_check_branch
          %2490 = sbr.rel (%p2488) target = $region56
        $region55: #{resnet_l0_forward.1} parent=51 // pred_region
          %s2492 = ssub.s32 16, 16
          %2493 = vsyncadd %s2481, %s2492
          %s2494 = smul.addr %s24, 16
          %s2495 = scalar_lea.hbm %s8, %s2494
          %s2497 = sshll.u32 %s2483, 4
          %s2498 = int_to_ptr.vmem [resolvable:$true] %s2497
          %2500 = dma.vmem_to_hbm [thread:$0]  %s2498, 16, %s2495, %s2481
        $region56: #{resnet_l0_forward.1} parent=51 // pred_fallthru
          _
        // Predicated region
        $region57: #{resnet_l0_forward.1} parent=51 // pred_check
          %p2501 = pneg %p241
        $region58: #{resnet_l0_forward.1} parent=51 // pred_check_branch
          %2503 = sbr.rel (%p2501) target = $region60
        $region59: #{resnet_l0_forward.1} parent=51 // pred_region
          _
        $region60: #{resnet_l0_forward.1} parent=51 // pred_fallthru
          _
      $region52: #{resnet_l0_forward.1} parent=5 // pred_fallthru
        _
      %p2504 = scmp.le.s32.totalorder 2, %s19
      // Predicated region
      $region61: #{resnet_l0_forward.1} parent=5 // pred_check
        %p2505 = pneg %p2504
      $region62: #{resnet_l0_forward.1} parent=5 // pred_check_branch
        %2507 = sbr.rel (%p2505) target = $region64
      $region63: #{resnet_l0_forward.1} parent=5 // pred_region
        %s2508 = ssub.s32 %s19, 2
        // Predicated region
        $region65: #{resnet_l0_forward.1} parent=63 // pred_check
          %p2509 = pneg %p221
        $region66: #{resnet_l0_forward.1} parent=63 // pred_check_branch
          %2511 = sbr.rel (%p2509) target = $region68
        $region67: #{resnet_l0_forward.1} parent=63 // pred_region
          %s2512 = sand.u32 %s206, 1
          %s2513 = scalar_lea.sflag [#allocation3], %s2512
          %s2514 = sand.u32 %s206, 1
          %s2515 = scalar_lea.vmem [#allocation2], %s2514
          %2516 = dma.done %s2513, 16
        $region68: #{resnet_l0_forward.1} parent=63 // pred_fallthru
          _
        // Predicated region
        $region69: #{resnet_l0_forward.1} parent=63 // pred_check
          %p2517 = pneg %p247
        $region70: #{resnet_l0_forward.1} parent=63 // pred_check_branch
          %2519 = sbr.rel (%p2517) target = $region72
        $region71: #{resnet_l0_forward.1} parent=63 // pred_region
          %p2520 = scmp.lt.s32.totalorder %s25, 1
          %s2521 = scalar_select %p2520, %s25, 1
          %s2522 = smul.addr %s2521, 4
          %s2523 = scalar_lea.vmem %s9, %s2522
        $region72: #{resnet_l0_forward.1} parent=63 // pred_fallthru
          _
      $region64: #{resnet_l0_forward.1} parent=5 // pred_fallthru
        _
    $region6: #{resnet_l0_forward.1} parent=1 // loop_footer
      %s23 = sadd.s32 1, %s19
    $region7: #{resnet_l0_forward.1} parent=1 // loop_footer_branch
      %18 = sbr.rel target = $region3
    $region8: #{resnet_l0_forward.1} parent=1 // loop_exit
      _
    %2524 = vsyncpa [#allocation3], 1
    %s2525 = scalar_lea.sflag [#allocation3], 1
    %2526 = vsyncpa %s2525, 1

</llo_original>
